<compile_context>
chip_gen: v7x
topology: tpu7x:2x2x1
jax: 0.10.0
libtpu: 0.0.40
codegen_flags: <defaults>
</compile_context>

<pallas_src>
import jax
import jax.numpy as jnp
import numpy as np
from jax import lax
from jax.experimental import pallas as pl
from jax.experimental.pallas import tpu as pltpu


# ----------------------------------------------------------------------------
# Fused kernel. Per grid step (n, rb) it sees TR input rows plus a 1-row halo,
# computes y1 = relu(bn1(conv1(x))), then the 4 sub-pixel phases of the
# transposed conv + bn2 + relu, then conv3 + bn3 + relu, and stores one
# phase-packed (TR, W, 4*Cout) block.
# ----------------------------------------------------------------------------
def _fused_decoder_kernel(x_ref, xh_ref, w1_ref, wd_ref, w3_ref,
                          s1_ref, b1_ref, s2_ref, b2_ref, s3_ref, b3_ref,
                          o_ref):
    _, TR, W, Cin = x_ref.shape
    Cmid = w1_ref.shape[1]
    C4out = o_ref.shape[3]
    M = TR * W

    # ---- stage 1: 1x1 conv + BN + ReLU on the TR main rows (one big matmul) ----
    y1m = jnp.dot(x_ref[0].reshape(M, Cin), w1_ref[...],
                  preferred_element_type=jnp.float32)
    y1m = jnp.maximum(y1m * s1_ref[...] + b1_ref[...], 0.0)            # (M, Cmid)

    # Halo row = first row of the next row-block (needed by the odd output rows).
    # On the last row-block it lies past the image bottom and must contribute zero.
    is_last = pl.program_id(1) == pl.num_programs(1) - 1
    halo_scale = jnp.where(is_last, 0.0, 1.0)
    y1h = jnp.dot(xh_ref[0].reshape(W, Cin), w1_ref[...],
                  preferred_element_type=jnp.float32)
    y1h = jnp.maximum(y1h * s1_ref[...] + b1_ref[...], 0.0) * halo_scale

    y1 = jnp.concatenate([y1m, y1h], axis=0).reshape(TR + 1, W, Cmid)

    # ---- stage 2: ConvTranspose2d(3, s=2, p=1, op=1) via its 4 sub-pixel phases ----
    # out[2r+a, 2c+b] only reads y1[r / r+1, c / c+1]; the 4 shifted views below
    # cover all 9 taps without ever building the zero-dilated tensor.
    Y0 = y1[:TR]                                            # y1[r,   c]
    Y1 = y1[1:TR + 1]                                       # y1[r+1, c]
    zcol = jnp.zeros((TR, 1, Cmid), jnp.float32)
    Y0s = jnp.concatenate([Y0[:, 1:, :], zcol], axis=1)     # y1[r,   c+1]
    Y1s = jnp.concatenate([Y1[:, 1:, :], zcol], axis=1)     # y1[r+1, c+1]

    y2 = (jnp.dot(Y0.reshape(M, Cmid),  wd_ref[0], preferred_element_type=jnp.float32)
          + jnp.dot(Y0s.reshape(M, Cmid), wd_ref[1], preferred_element_type=jnp.float32)
          + jnp.dot(Y1.reshape(M, Cmid),  wd_ref[2], preferred_element_type=jnp.float32)
          + jnp.dot(Y1s.reshape(M, Cmid), wd_ref[3], preferred_element_type=jnp.float32))
    y2 = jnp.maximum(y2 * s2_ref[...] + b2_ref[...], 0.0)   # (M, 4*Cmid), phase-packed

    # ---- stage 3: 1x1 conv + BN + ReLU (block-diagonal over the 4 phases) ----
    y3 = jnp.dot(y2, w3_ref[...], preferred_element_type=jnp.float32)
    y3 = jnp.maximum(y3 * s3_ref[...] + b3_ref[...], 0.0)   # (M, 4*Cout)

    # single whole-block store (phase-packed -> denser lanes than Cout alone)
    o_ref[0] = y3.reshape(TR, W, C4out).astype(o_ref.dtype)


def _pick_row_tile(H, W, target_px=1024):
    """Largest row tile TR dividing H with TR*W <= target_px pixels per block.
    Prefers a proper divisor so the pipeline has >1 step along the row axis."""
    divs = [d for d in range(1, H + 1) if H % d == 0 and d * W <= target_px]
    if not divs:
        return 1
    proper = [d for d in divs if d < H]
    return max(proper) if proper else max(divs)


# ----------------------------------------------------------------------------
# Parameter setup (deterministic, synthetic) + BN folding
# ----------------------------------------------------------------------------
def fold_bn(conv_bias, gamma, beta, mean, var, eps=1e-5):
    scale = gamma / jnp.sqrt(var + eps)
    bias = (conv_bias - mean) * scale + beta
    return scale, bias


def init_params(key, in_channels, n_filters):
    cmid = in_channels // 4
    ks = jax.random.split(key, 18)

    def bn(k1, k2, k3, k4, c):
        gamma = jax.random.uniform(k1, (c,), jnp.float32, 0.5, 1.5)
        beta = 0.1 * jax.random.normal(k2, (c,), jnp.float32)
        mean = 0.1 * jax.random.normal(k3, (c,), jnp.float32)
        var = jax.random.uniform(k4, (c,), jnp.float32, 0.5, 1.5)
        return gamma, beta, mean, var

    # conv1: 1x1, torch weight (cmid, Cin, 1, 1) -> matmul weight (Cin, cmid)
    w1 = 0.1 * jax.random.normal(ks[0], (in_channels, cmid), jnp.float32)
    cb1 = 0.1 * jax.random.normal(ks[1], (cmid,), jnp.float32)
    s1, b1 = fold_bn(cb1, *bn(ks[2], ks[3], ks[4], ks[5], cmid))

    # deconv2: torch ConvTranspose2d weight layout (Cin, Cout, kH, kW)
    wt2 = 0.1 * jax.random.normal(ks[6], (cmid, cmid, 3, 3), jnp.float32)
    cb2 = 0.1 * jax.random.normal(ks[7], (cmid,), jnp.float32)
    # equivalent forward-conv HWIO kernel: flip spatial, move (ci, co) to the back
    w2_eq = jnp.transpose(wt2[:, :, ::-1, ::-1], (2, 3, 0, 1))       # (3,3,cmid,cmid)
    s2, b2 = fold_bn(cb2, *bn(ks[8], ks[9], ks[10], ks[11], cmid))

    # conv3: 1x1, torch weight (n_filters, cmid, 1, 1) -> (cmid, n_filters)
    w3 = 0.1 * jax.random.normal(ks[12], (cmid, n_filters), jnp.float32)
    cb3 = 0.1 * jax.random.normal(ks[13], (n_filters,), jnp.float32)
    s3, b3 = fold_bn(cb3, *bn(ks[14], ks[15], ks[16], ks[17], n_filters))

    return dict(w1=w1, s1=s1, b1=b1, w2_eq=w2_eq, s2=s2, b2=b2, w3=w3, s3=s3, b3=b3)


# ----------------------------------------------------------------------------
# Full DecoderBlock forward: one fused pallas_call + cheap XLA layout glue.
# ----------------------------------------------------------------------------
def decoder_block_forward(x_nchw, p):
    N, Cin, H, W = x_nchw.shape
    Cmid = p["w1"].shape[1]
    Cout = p["w3"].shape[1]
    w_eq = p["w2_eq"]                                            # (3,3,Cmid,Cmid) HWIO
    x = jnp.transpose(x_nchw, (0, 2, 3, 1)).astype(jnp.float32)  # NCHW -> NHWC

    # Per-tap deconv weights for the 4 shifted y1 views, each mapping Cmid -> the
    # 4 phase groups [p00 | p01 | p10 | p11], where p_ab feeds out[2r+a, 2c+b].
    Z = jnp.zeros((Cmid, Cmid), jnp.float32)
    wd = jnp.stack([
        jnp.concatenate([w_eq[1, 1], w_eq[1, 0], w_eq[0, 1], w_eq[0, 0]], axis=1),  # y1[r,  c]
        jnp.concatenate([Z,          w_eq[1, 2], Z,          w_eq[0, 2]], axis=1),  # y1[r,  c+1]
        jnp.concatenate([Z,          Z,          w_eq[2, 1], w_eq[2, 0]], axis=1),  # y1[r+1,c]
        jnp.concatenate([Z,          Z,          Z,          w_eq[2, 2]], axis=1),  # y1[r+1,c+1]
    ], axis=0)                                                   # (4, Cmid, 4*Cmid)

    # conv3 applied independently per phase group -> block-diagonal (4*Cmid, 4*Cout)
    w3 = p["w3"]
    Zc = jnp.zeros((Cmid, Cout), jnp.float32)
    w3b = jnp.concatenate([
        jnp.concatenate([w3, Zc, Zc, Zc], axis=1),
        jnp.concatenate([Zc, w3, Zc, Zc], axis=1),
        jnp.concatenate([Zc, Zc, w3, Zc], axis=1),
        jnp.concatenate([Zc, Zc, Zc, w3], axis=1),
    ], axis=0)                                                   # (4*Cmid, 4*Cout)

    s1 = p["s1"].reshape(1, Cmid)
    b1 = p["b1"].reshape(1, Cmid)
    s2 = jnp.tile(p["s2"], 4).reshape(1, 4 * Cmid)
    b2 = jnp.tile(p["b2"], 4).reshape(1, 4 * Cmid)
    s3 = jnp.tile(p["s3"], 4).reshape(1, 4 * Cout)
    b3 = jnp.tile(p["b3"], 4).reshape(1, 4 * Cout)

    TR = _pick_row_tile(H, W)        # ~512-1024 pixels per block; keeps v7x VMEM small
    RB = H // TR
    Mtot = N * H * W
    cost = pl.CostEstimate(
        flops=2 * Mtot * (Cin * Cmid + 16 * Cmid * Cmid + 16 * Cmid * Cout),
        transcendentals=0,
        bytes_accessed=4 * (Mtot * Cin + Mtot * 4 * Cout
                            + Cin * Cmid + 16 * Cmid * Cmid + 16 * Cmid * Cout),
    )

    packed = pl.pallas_call(
        _fused_decoder_kernel,
        out_shape=jax.ShapeDtypeStruct((N, H, W, 4 * Cout), jnp.float32),
        grid=(N, RB),
        in_specs=[
            pl.BlockSpec((1, TR, W, Cin), lambda n, rb: (n, rb, 0, 0)),
            # 1-row halo: first row of the next block (clamped on the last block,
            # then zeroed inside the kernel).
            pl.BlockSpec((1, 1, W, Cin),
                         lambda n, rb: (n, jnp.minimum((rb + 1) * TR, H - 1), 0, 0)),
            pl.BlockSpec((Cin, Cmid), lambda n, rb: (0, 0)),
            pl.BlockSpec((4, Cmid, 4 * Cmid), lambda n, rb: (0, 0, 0)),
            pl.BlockSpec((4 * Cmid, 4 * Cout), lambda n, rb: (0, 0)),
            pl.BlockSpec((1, Cmid), lambda n, rb: (0, 0)),
            pl.BlockSpec((1, Cmid), lambda n, rb: (0, 0)),
            pl.BlockSpec((1, 4 * Cmid), lambda n, rb: (0, 0)),
            pl.BlockSpec((1, 4 * Cmid), lambda n, rb: (0, 0)),
            pl.BlockSpec((1, 4 * Cout), lambda n, rb: (0, 0)),
            pl.BlockSpec((1, 4 * Cout), lambda n, rb: (0, 0)),
        ],
        out_specs=pl.BlockSpec((1, TR, W, 4 * Cout), lambda n, rb: (n, rb, 0, 0)),
        compiler_params=pltpu.CompilerParams(
            dimension_semantics=("parallel", "parallel")),
        cost_estimate=cost,
    )(x, x, p["w1"], wd, w3b, s1, b1, s2, b2, s3, b3)

    # depth-to-space (unpack the 4 phases) + NHWC -> NCHW; a single fused XLA pass.
    y = packed.reshape(N, H, W, 2, 2, Cout)
    y = jnp.transpose(y, (0, 1, 3, 2, 4, 5)).reshape(N, 2 * H, 2 * W, Cout)
    return jnp.transpose(y, (0, 3, 1, 2))


# Pure-JAX reference (same eval-mode BN folding) for a correctness check.
def decoder_block_reference(x_nchw, p):
    x = jnp.transpose(x_nchw, (0, 2, 3, 1)).astype(jnp.float32)

    def pw(x, w, s, b):
        return jnp.maximum(jnp.einsum("nhwc,cd->nhwd", x, w) * s + b, 0.0)

    y1 = pw(x, p["w1"], p["s1"], p["b1"])
    y2 = lax.conv_general_dilated(
        y1, p["w2_eq"], window_strides=(1, 1),
        padding=((1, 2), (1, 2)), lhs_dilation=(2, 2),
        dimension_numbers=("NHWC", "HWIO", "NHWC"))
    y2 = jnp.maximum(y2 * p["s2"] + p["b2"], 0.0)
    y3 = pw(y2, p["w3"], p["s3"], p["b3"])
    return jnp.transpose(y3, (0, 3, 1, 2))


if __name__ == "__main__":
    key = jax.random.PRNGKey(0)
    in_channels, n_filters = 16, 8
    N, H, W = 2, 8, 8

    kx, kp = jax.random.split(key)
    x = jax.random.normal(kx, (N, in_channels, H, W), jnp.float32)
    params = init_params(kp, in_channels, n_filters)

    fwd = jax.jit(decoder_block_forward)
    out = jax.block_until_ready(fwd(x, params))
    ref = jax.block_until_ready(decoder_block_reference(x, params))

    assert out.shape == (N, n_filters, 2 * H, 2 * W), out.shape
    np.testing.assert_allclose(np.asarray(out), np.asarray(ref), rtol=2e-4, atol=2e-4)
    print("KERNEL_OK")
</pallas_src>

<mosaic_0001>
module attributes {stable_mosaic.version = 11 : i64} {
  func.func @_fused_decoder_kernel(%arg0: i32, %arg1: i32, %arg2: memref<1x4x8x16xf32, #tpu.memory_space<vmem>>, %arg3: memref<1x1x8x16xf32, #tpu.memory_space<vmem>>, %arg4: memref<16x4xf32, #tpu.memory_space<vmem>>, %arg5: memref<4x4x16xf32, #tpu.memory_space<vmem>>, %arg6: memref<16x32xf32, #tpu.memory_space<vmem>>, %arg7: memref<1x4xf32, #tpu.memory_space<vmem>>, %arg8: memref<1x4xf32, #tpu.memory_space<vmem>>, %arg9: memref<1x16xf32, #tpu.memory_space<vmem>>, %arg10: memref<1x16xf32, #tpu.memory_space<vmem>>, %arg11: memref<1x32xf32, #tpu.memory_space<vmem>>, %arg12: memref<1x32xf32, #tpu.memory_space<vmem>>, %arg13: memref<1x4x8x32xf32, #tpu.memory_space<vmem>>) attributes {dimension_semantics = [#tpu.dimension_semantics<parallel>, #tpu.dimension_semantics<parallel>], iteration_bounds = array<i64: 2, 2>, scalar_prefetch = 0 : i64, scratch_operands = 0 : i64, tpu.core_type = #tpu.core_type<tc>, window_params = [{transform_indices = @transform_0, window_bounds = array<i64: 1, 4, 8, 16>}, {transform_indices = @transform_1, window_bounds = array<i64: 1, 1, 8, 16>}, {pipeline_mode = #tpu.pipeline_mode<synchronous>, transform_indices = @transform_2, window_bounds = array<i64: 16, 4>}, {pipeline_mode = #tpu.pipeline_mode<synchronous>, transform_indices = @transform_3, window_bounds = array<i64: 4, 4, 16>}, {pipeline_mode = #tpu.pipeline_mode<synchronous>, transform_indices = @transform_4, window_bounds = array<i64: 16, 32>}, {pipeline_mode = #tpu.pipeline_mode<synchronous>, transform_indices = @transform_5, window_bounds = array<i64: 1, 4>}, {pipeline_mode = #tpu.pipeline_mode<synchronous>, transform_indices = @transform_6, window_bounds = array<i64: 1, 4>}, {pipeline_mode = #tpu.pipeline_mode<synchronous>, transform_indices = @transform_7, window_bounds = array<i64: 1, 16>}, {pipeline_mode = #tpu.pipeline_mode<synchronous>, transform_indices = @transform_8, window_bounds = array<i64: 1, 16>}, {pipeline_mode = #tpu.pipeline_mode<synchronous>, transform_indices = @transform_9, window_bounds = array<i64: 1, 32>}, {pipeline_mode = #tpu.pipeline_mode<synchronous>, transform_indices = @transform_10, window_bounds = array<i64: 1, 32>}, {transform_indices = @transform_11, window_bounds = array<i64: 1, 4, 8, 32>}]} {
    %c0 = arith.constant 0 : index
    %c0_0 = arith.constant 0 : index
    %c0_1 = arith.constant 0 : index
    %c0_2 = arith.constant 0 : index
    %0 = vector.load %arg2[%c0, %c0_0, %c0_1, %c0_2] : memref<1x4x8x16xf32, #tpu.memory_space<vmem>>, vector<1x4x8x16xf32>
    %1 = vector.shape_cast %0 : vector<1x4x8x16xf32> to vector<4x8x16xf32>
    %2 = vector.shape_cast %1 : vector<4x8x16xf32> to vector<32x16xf32>
    %c0_3 = arith.constant 0 : index
    %c0_4 = arith.constant 0 : index
    %3 = vector.load %arg4[%c0_3, %c0_4] : memref<16x4xf32, #tpu.memory_space<vmem>>, vector<16x4xf32>
    %cst = arith.constant dense<0.000000e+00> : vector<32x4xf32>
    %4 = tpu.matmul %2, %3, %cst {dimension_numbers = #tpu.dot_dimension_numbers<[1], [0], [0], [1], [0, 0, 1, 1], [], []>} : vector<32x16xf32>, vector<16x4xf32>, vector<32x4xf32> -> vector<32x4xf32>
    %c0_5 = arith.constant 0 : index
    %c0_6 = arith.constant 0 : index
    %5 = vector.load %arg7[%c0_5, %c0_6] : memref<1x4xf32, #tpu.memory_space<vmem>>, vector<1x4xf32>
    %6 = vector.broadcast %5 : vector<1x4xf32> to vector<32x4xf32>
    %7 = arith.mulf %4, %6 : vector<32x4xf32>
    %c0_7 = arith.constant 0 : index
    %c0_8 = arith.constant 0 : index
    %8 = vector.load %arg8[%c0_7, %c0_8] : memref<1x4xf32, #tpu.memory_space<vmem>>, vector<1x4xf32>
    %9 = vector.broadcast %8 : vector<1x4xf32> to vector<32x4xf32>
    %10 = arith.addf %7, %9 : vector<32x4xf32>
    %cst_9 = arith.constant 0.000000e+00 : f32
    %11 = vector.broadcast %cst_9 : f32 to vector<32x4xf32>
    %12 = arith.maximumf %10, %11 : vector<32x4xf32>
    %c1_i32 = arith.constant 1 : i32
    %13 = arith.cmpi eq, %arg1, %c1_i32 : i32
    %cst_10 = arith.constant 0.000000e+00 : f32
    %cst_11 = arith.constant 1.000000e+00 : f32
    %14 = arith.select %13, %cst_10, %cst_11 : f32
    %c0_12 = arith.constant 0 : index
    %c0_13 = arith.constant 0 : index
    %c0_14 = arith.constant 0 : index
    %c0_15 = arith.constant 0 : index
    %15 = vector.load %arg3[%c0_12, %c0_13, %c0_14, %c0_15] : memref<1x1x8x16xf32, #tpu.memory_space<vmem>>, vector<1x1x8x16xf32>
    %16 = vector.shape_cast %15 : vector<1x1x8x16xf32> to vector<1x8x16xf32>
    %17 = vector.shape_cast %16 : vector<1x8x16xf32> to vector<8x16xf32>
    %c0_16 = arith.constant 0 : index
    %c0_17 = arith.constant 0 : index
    %18 = vector.load %arg4[%c0_16, %c0_17] : memref<16x4xf32, #tpu.memory_space<vmem>>, vector<16x4xf32>
    %cst_18 = arith.constant dense<0.000000e+00> : vector<8x4xf32>
    %19 = tpu.matmul %17, %18, %cst_18 {dimension_numbers = #tpu.dot_dimension_numbers<[1], [0], [0], [1], [0, 0, 1, 1], [], []>} : vector<8x16xf32>, vector<16x4xf32>, vector<8x4xf32> -> vector<8x4xf32>
    %c0_19 = arith.constant 0 : index
    %c0_20 = arith.constant 0 : index
    %20 = vector.load %arg7[%c0_19, %c0_20] : memref<1x4xf32, #tpu.memory_space<vmem>>, vector<1x4xf32>
    %21 = vector.broadcast %20 : vector<1x4xf32> to vector<8x4xf32>
    %22 = arith.mulf %19, %21 : vector<8x4xf32>
    %c0_21 = arith.constant 0 : index
    %c0_22 = arith.constant 0 : index
    %23 = vector.load %arg8[%c0_21, %c0_22] : memref<1x4xf32, #tpu.memory_space<vmem>>, vector<1x4xf32>
    %24 = vector.broadcast %23 : vector<1x4xf32> to vector<8x4xf32>
    %25 = arith.addf %22, %24 : vector<8x4xf32>
    %cst_23 = arith.constant 0.000000e+00 : f32
    %26 = vector.broadcast %cst_23 : f32 to vector<8x4xf32>
    %27 = arith.maximumf %25, %26 : vector<8x4xf32>
    %28 = vector.broadcast %14 : f32 to vector<8x4xf32>
    %29 = arith.mulf %27, %28 : vector<8x4xf32>
    %30 = tpu.concatenate %12, %29 in 0 : vector<32x4xf32>, vector<8x4xf32> -> vector<40x4xf32>
    %31 = vector.shape_cast %30 : vector<40x4xf32> to vector<5x8x4xf32>
    %32 = vector.extract_strided_slice %31 {offsets = [0, 0, 0], sizes = [4, 8, 4], strides = [1, 1, 1]} : vector<5x8x4xf32> to vector<4x8x4xf32>
    %33 = vector.extract_strided_slice %31 {offsets = [1, 0, 0], sizes = [4, 8, 4], strides = [1, 1, 1]} : vector<5x8x4xf32> to vector<4x8x4xf32>
    %cst_24 = arith.constant 0.000000e+00 : f32
    %34 = vector.broadcast %cst_24 : f32 to vector<4x1x4xf32>
    %35 = vector.extract_strided_slice %32 {offsets = [0, 1, 0], sizes = [4, 7, 4], strides = [1, 1, 1]} : vector<4x8x4xf32> to vector<4x7x4xf32>
    %36 = tpu.concatenate %35, %34 in 1 : vector<4x7x4xf32>, vector<4x1x4xf32> -> vector<4x8x4xf32>
    %37 = vector.extract_strided_slice %33 {offsets = [0, 1, 0], sizes = [4, 7, 4], strides = [1, 1, 1]} : vector<4x8x4xf32> to vector<4x7x4xf32>
    %38 = tpu.concatenate %37, %34 in 1 : vector<4x7x4xf32>, vector<4x1x4xf32> -> vector<4x8x4xf32>
    %39 = vector.shape_cast %32 : vector<4x8x4xf32> to vector<32x4xf32>
    %c0_25 = arith.constant 0 : index
    %c0_26 = arith.constant 0 : index
    %c0_27 = arith.constant 0 : index
    %40 = vector.load %arg5[%c0_25, %c0_26, %c0_27] : memref<4x4x16xf32, #tpu.memory_space<vmem>>, vector<1x4x16xf32>
    %41 = vector.shape_cast %40 : vector<1x4x16xf32> to vector<4x16xf32>
    %cst_28 = arith.constant dense<0.000000e+00> : vector<32x16xf32>
    %42 = tpu.matmul %39, %41, %cst_28 {dimension_numbers = #tpu.dot_dimension_numbers<[1], [0], [0], [1], [0, 0, 1, 1], [], []>} : vector<32x4xf32>, vector<4x16xf32>, vector<32x16xf32> -> vector<32x16xf32>
    %43 = vector.shape_cast %36 : vector<4x8x4xf32> to vector<32x4xf32>
    %c1 = arith.constant 1 : index
    %c0_29 = arith.constant 0 : index
    %c0_30 = arith.constant 0 : index
    %44 = vector.load %arg5[%c1, %c0_29, %c0_30] : memref<4x4x16xf32, #tpu.memory_space<vmem>>, vector<1x4x16xf32>
    %45 = vector.shape_cast %44 : vector<1x4x16xf32> to vector<4x16xf32>
    %cst_31 = arith.constant dense<0.000000e+00> : vector<32x16xf32>
    %46 = tpu.matmul %43, %45, %cst_31 {dimension_numbers = #tpu.dot_dimension_numbers<[1], [0], [0], [1], [0, 0, 1, 1], [], []>} : vector<32x4xf32>, vector<4x16xf32>, vector<32x16xf32> -> vector<32x16xf32>
    %47 = arith.addf %42, %46 : vector<32x16xf32>
    %48 = vector.shape_cast %33 : vector<4x8x4xf32> to vector<32x4xf32>
    %c2 = arith.constant 2 : index
    %c0_32 = arith.constant 0 : index
    %c0_33 = arith.constant 0 : index
    %49 = vector.load %arg5[%c2, %c0_32, %c0_33] : memref<4x4x16xf32, #tpu.memory_space<vmem>>, vector<1x4x16xf32>
    %50 = vector.shape_cast %49 : vector<1x4x16xf32> to vector<4x16xf32>
    %cst_34 = arith.constant dense<0.000000e+00> : vector<32x16xf32>
    %51 = tpu.matmul %48, %50, %cst_34 {dimension_numbers = #tpu.dot_dimension_numbers<[1], [0], [0], [1], [0, 0, 1, 1], [], []>} : vector<32x4xf32>, vector<4x16xf32>, vector<32x16xf32> -> vector<32x16xf32>
    %52 = arith.addf %47, %51 : vector<32x16xf32>
    %53 = vector.shape_cast %38 : vector<4x8x4xf32> to vector<32x4xf32>
    %c3 = arith.constant 3 : index
    %c0_35 = arith.constant 0 : index
    %c0_36 = arith.constant 0 : index
    %54 = vector.load %arg5[%c3, %c0_35, %c0_36] : memref<4x4x16xf32, #tpu.memory_space<vmem>>, vector<1x4x16xf32>
    %55 = vector.shape_cast %54 : vector<1x4x16xf32> to vector<4x16xf32>
    %cst_37 = arith.constant dense<0.000000e+00> : vector<32x16xf32>
    %56 = tpu.matmul %53, %55, %cst_37 {dimension_numbers = #tpu.dot_dimension_numbers<[1], [0], [0], [1], [0, 0, 1, 1], [], []>} : vector<32x4xf32>, vector<4x16xf32>, vector<32x16xf32> -> vector<32x16xf32>
    %57 = arith.addf %52, %56 : vector<32x16xf32>
    %c0_38 = arith.constant 0 : index
    %c0_39 = arith.constant 0 : index
    %58 = vector.load %arg9[%c0_38, %c0_39] : memref<1x16xf32, #tpu.memory_space<vmem>>, vector<1x16xf32>
    %59 = vector.broadcast %58 : vector<1x16xf32> to vector<32x16xf32>
    %60 = arith.mulf %57, %59 : vector<32x16xf32>
    %c0_40 = arith.constant 0 : index
    %c0_41 = arith.constant 0 : index
    %61 = vector.load %arg10[%c0_40, %c0_41] : memref<1x16xf32, #tpu.memory_space<vmem>>, vector<1x16xf32>
    %62 = vector.broadcast %61 : vector<1x16xf32> to vector<32x16xf32>
    %63 = arith.addf %60, %62 : vector<32x16xf32>
    %cst_42 = arith.constant 0.000000e+00 : f32
    %64 = vector.broadcast %cst_42 : f32 to vector<32x16xf32>
    %65 = arith.maximumf %63, %64 : vector<32x16xf32>
    %c0_43 = arith.constant 0 : index
    %c0_44 = arith.constant 0 : index
    %66 = vector.load %arg6[%c0_43, %c0_44] : memref<16x32xf32, #tpu.memory_space<vmem>>, vector<16x32xf32>
    %cst_45 = arith.constant dense<0.000000e+00> : vector<32x32xf32>
    %67 = tpu.matmul %65, %66, %cst_45 {dimension_numbers = #tpu.dot_dimension_numbers<[1], [0], [0], [1], [0, 0, 1, 1], [], []>} : vector<32x16xf32>, vector<16x32xf32>, vector<32x32xf32> -> vector<32x32xf32>
    %c0_46 = arith.constant 0 : index
    %c0_47 = arith.constant 0 : index
    %68 = vector.load %arg11[%c0_46, %c0_47] : memref<1x32xf32, #tpu.memory_space<vmem>>, vector<1x32xf32>
    %69 = vector.broadcast %68 : vector<1x32xf32> to vector<32x32xf32>
    %70 = arith.mulf %67, %69 : vector<32x32xf32>
    %c0_48 = arith.constant 0 : index
    %c0_49 = arith.constant 0 : index
    %71 = vector.load %arg12[%c0_48, %c0_49] : memref<1x32xf32, #tpu.memory_space<vmem>>, vector<1x32xf32>
    %72 = vector.broadcast %71 : vector<1x32xf32> to vector<32x32xf32>
    %73 = arith.addf %70, %72 : vector<32x32xf32>
    %cst_50 = arith.constant 0.000000e+00 : f32
    %74 = vector.broadcast %cst_50 : f32 to vector<32x32xf32>
    %75 = arith.maximumf %73, %74 : vector<32x32xf32>
    %76 = vector.shape_cast %75 : vector<32x32xf32> to vector<4x8x32xf32>
    %c0_51 = arith.constant 0 : index
    %c0_52 = arith.constant 0 : index
    %c0_53 = arith.constant 0 : index
    %c0_54 = arith.constant 0 : index
    %77 = vector.load %arg13[%c0_51, %c0_52, %c0_53, %c0_54] : memref<1x4x8x32xf32, #tpu.memory_space<vmem>>, vector<1x4x8x32xf32>
    %78 = vector.shape_cast %77 : vector<1x4x8x32xf32> to vector<4x8x32xf32>
    %79 = vector.shape_cast %76 : vector<4x8x32xf32> to vector<1x4x8x32xf32>
    tpu.vector_store %arg13[%c0_51, %c0_52, %c0_53, %c0_54], %79 {strides = array<i32>} : memref<1x4x8x32xf32, #tpu.memory_space<vmem>>, vector<1x4x8x32xf32>,
    return
  }
  func.func @transform_0(%arg0: i32, %arg1: i32) -> (i32, i32, i32, i32) {
    %c0_i32 = arith.constant 0 : i32
    %c0_i32_0 = arith.constant 0 : i32
    %c0_i32_1 = arith.constant 0 : i32
    return %arg0, %arg1, %c0_i32, %c0_i32_0 : i32, i32, i32, i32
  }
  func.func @transform_1(%arg0: i32, %arg1: i32) -> (i32, i32, i32, i32) {
    %c1_i32 = arith.constant 1 : i32
    %0 = arith.addi %arg1, %c1_i32 : i32
    %c4_i32 = arith.constant 4 : i32
    %1 = arith.muli %0, %c4_i32 : i32
    %c7_i32 = arith.constant 7 : i32
    %2 = arith.minsi %1, %c7_i32 : i32
    %c0_i32 = arith.constant 0 : i32
    %c0_i32_0 = arith.constant 0 : i32
    %c0_i32_1 = arith.constant 0 : i32
    return %arg0, %2, %c0_i32, %c0_i32_0 : i32, i32, i32, i32
  }
  func.func @transform_2(%arg0: i32, %arg1: i32) -> (i32, i32) {
    %c0_i32 = arith.constant 0 : i32
    %c0_i32_0 = arith.constant 0 : i32
    %c0_i32_1 = arith.constant 0 : i32
    return %c0_i32, %c0_i32_0 : i32, i32
  }
  func.func @transform_3(%arg0: i32, %arg1: i32) -> (i32, i32, i32) {
    %c0_i32 = arith.constant 0 : i32
    %c0_i32_0 = arith.constant 0 : i32
    %c0_i32_1 = arith.constant 0 : i32
    %c0_i32_2 = arith.constant 0 : i32
    return %c0_i32, %c0_i32_0, %c0_i32_1 : i32, i32, i32
  }
  func.func @transform_4(%arg0: i32, %arg1: i32) -> (i32, i32) {
    %c0_i32 = arith.constant 0 : i32
    %c0_i32_0 = arith.constant 0 : i32
    %c0_i32_1 = arith.constant 0 : i32
    return %c0_i32, %c0_i32_0 : i32, i32
  }
  func.func @transform_5(%arg0: i32, %arg1: i32) -> (i32, i32) {
    %c0_i32 = arith.constant 0 : i32
    %c0_i32_0 = arith.constant 0 : i32
    %c0_i32_1 = arith.constant 0 : i32
    return %c0_i32, %c0_i32_0 : i32, i32
  }
  func.func @transform_6(%arg0: i32, %arg1: i32) -> (i32, i32) {
    %c0_i32 = arith.constant 0 : i32
    %c0_i32_0 = arith.constant 0 : i32
    %c0_i32_1 = arith.constant 0 : i32
    return %c0_i32, %c0_i32_0 : i32, i32
  }
  func.func @transform_7(%arg0: i32, %arg1: i32) -> (i32, i32) {
    %c0_i32 = arith.constant 0 : i32
    %c0_i32_0 = arith.constant 0 : i32
    %c0_i32_1 = arith.constant 0 : i32
    return %c0_i32, %c0_i32_0 : i32, i32
  }
  func.func @transform_8(%arg0: i32, %arg1: i32) -> (i32, i32) {
    %c0_i32 = arith.constant 0 : i32
    %c0_i32_0 = arith.constant 0 : i32
    %c0_i32_1 = arith.constant 0 : i32
    return %c0_i32, %c0_i32_0 : i32, i32
  }
  func.func @transform_9(%arg0: i32, %arg1: i32) -> (i32, i32) {
    %c0_i32 = arith.constant 0 : i32
    %c0_i32_0 = arith.constant 0 : i32
    %c0_i32_1 = arith.constant 0 : i32
    return %c0_i32, %c0_i32_0 : i32, i32
  }
  func.func @transform_10(%arg0: i32, %arg1: i32) -> (i32, i32) {
    %c0_i32 = arith.constant 0 : i32
    %c0_i32_0 = arith.constant 0 : i32
    %c0_i32_1 = arith.constant 0 : i32
    return %c0_i32, %c0_i32_0 : i32, i32
  }
  func.func @transform_11(%arg0: i32, %arg1: i32) -> (i32, i32, i32, i32) {
    %c0_i32 = arith.constant 0 : i32
    %c0_i32_0 = arith.constant 0 : i32
    %c0_i32_1 = arith.constant 0 : i32
    return %arg0, %arg1, %c0_i32, %c0_i32_0 : i32, i32, i32, i32
  }
}

</mosaic_0001>

<llo_original>
// kernel: tile.38
$region0: #{tile.38}
  #allocation0 [shape = 's32[1]{0}', space=sflag, size = 0x4, scoped, tag = 'scoped memory for tile.38']
  %s0 = inlined_call_operand.vmem [shape: f32[8], index: 0, kind: input, shape index: {}]
  %s1 = inlined_call_operand.vmem [shape: f32[4,8], index: 1, kind: output, shape index: {}]
  // Predicated region
  $region2: #{tile.38} parent=0 // pred_check
    _
  $region3: #{tile.38} parent=0 // pred_check_branch
    %3 = sbr.rel (0) target = $region5
  $region4: #{tile.38} parent=0 // pred_region
    _
  $region5: #{tile.38} parent=0 // pred_fallthru
    _
  %v4 = vld [vmem:[%s0] ss:$0 sm:$0xff]
  %5 = vst [vmem:[%s1] sm:$0xf] %v4

// kernel: tile.28
$region0: #{tile.28}
  #allocation0 [shape = 's32[1]{0}', space=sflag, size = 0x4, scoped, tag = 'scoped memory for tile.28']
  %s0 = inlined_call_operand.vmem [shape: f32[4], index: 0, kind: input, shape index: {}]
  %s1 = inlined_call_operand.vmem [shape: f32[4,4], index: 1, kind: output, shape index: {}]
  // Predicated region
  $region2: #{tile.28} parent=0 // pred_check
    _
  $region3: #{tile.28} parent=0 // pred_check_branch
    %3 = sbr.rel (0) target = $region5
  $region4: #{tile.28} parent=0 // pred_region
    _
  $region5: #{tile.28} parent=0 // pred_fallthru
    _
  %v4 = vld [vmem:[%s0] ss:$0 sm:$0xff]
  %5 = vst [vmem:[%s1] sm:$0xf] %v4

// kernel: tile.39
$region0: #{tile.39}
  %s0 = inlined_call_operand.vmem [shape: f32[4,8], index: 0, kind: input, shape index: {}]
  %s1 = inlined_call_operand.vmem [shape: f32[1,32], index: 1, kind: output, shape index: {}]
  $region1: #{tile.39} parent=0
    #allocation0 [shape = 'u8[4096]{0}', space=vmem, size = 0x1000, scoped, tag = 'scoped mem for output reshape']
    #allocation1 [shape = 'u8[4096]{0}', space=vmem, size = 0x1000, scoped, tag = 'scoped mem for input reshape']
    %s3 = sshllo.u32 0, 4
    %v4 = vld [vmem:[%s0] sm:%s3]
    %5 = vst [vmem:[#allocation1] sm:%s3] %v4
    %v6 = vld [vmem:[#allocation1] sm:$0x1]
    %vm7 = vcmask 64512
    %8 = vst.msk [vmem:[#allocation0] sm:$0x1] %vm7, %v6
    %s9 = scalar_lea.vmem [#allocation1], 3
    %v10 = vld [vmem:[%s9] sm:$0x1]
    %11 = vrot.lane.b32.xlu0 %v10, 24
    %v12 = vpop.permute.xlu0 %11
    %vm13 = vcmask 261312
    %14 = vst.msk [vmem:[#allocation0] sm:$0x1] %vm13, %v12
    %s15 = scalar_lea.vmem [#allocation1], 2
    %v16 = vld [vmem:[%s15] sm:$0x1]
    %17 = vrot.lane.b32.xlu0 %v16, 16
    %v18 = vpop.permute.xlu0 %17
    %vm19 = vcmask 195712
    %20 = vst.msk [vmem:[#allocation0] sm:$0x1] %vm19, %v18
    %s21 = scalar_lea.vmem [#allocation1], 1
    %v22 = vld [vmem:[%s21] sm:$0x1]
    %23 = vrot.lane.b32.xlu0 %v22, 8
    %v24 = vpop.permute.xlu0 %23
    %vm25 = vcmask 130112
    %26 = vst.msk [vmem:[#allocation0] sm:$0x1] %vm25, %v24
    %s28 = sshllo.u32 0, 1
    %v30 = vld [vmem:[#allocation0] sm:%s28]
    %s31 = sshllo.u32 0, 1
    %32 = vst [vmem:[%s1] sm:%s31] %v30

// kernel: tile.29
$region0: #{tile.29}
  %s0 = inlined_call_operand.vmem [shape: f32[4,4], index: 0, kind: input, shape index: {}]
  %s1 = inlined_call_operand.vmem [shape: f32[1,16], index: 1, kind: output, shape index: {}]
  $region1: #{tile.29} parent=0
    #allocation0 [shape = 'u8[4096]{0}', space=vmem, size = 0x1000, scoped, tag = 'scoped mem for output reshape']
    #allocation1 [shape = 'u8[4096]{0}', space=vmem, size = 0x1000, scoped, tag = 'scoped mem for input reshape']
    %s3 = sshllo.u32 0, 4
    %v4 = vld [vmem:[%s0] sm:%s3]
    %5 = vst [vmem:[#allocation1] sm:%s3] %v4
    %v6 = vld [vmem:[#allocation1] sm:$0x1]
    %vm7 = vcmask 31744
    %8 = vst.msk [vmem:[#allocation0] sm:$0x1] %vm7, %v6
    %s9 = scalar_lea.vmem [#allocation1], 3
    %v10 = vld [vmem:[%s9] sm:$0x1]
    %11 = vrot.lane.b32.xlu0 %v10, 12
    %v12 = vpop.permute.xlu0 %11
    %vm13 = vcmask 130144
    %14 = vst.msk [vmem:[#allocation0] sm:$0x1] %vm13, %v12
    %s15 = scalar_lea.vmem [#allocation1], 2
    %v16 = vld [vmem:[%s15] sm:$0x1]
    %17 = vrot.lane.b32.xlu0 %v16, 8
    %v18 = vpop.permute.xlu0 %17
    %vm19 = vcmask 97344
    %20 = vst.msk [vmem:[#allocation0] sm:$0x1] %vm19, %v18
    %s21 = scalar_lea.vmem [#allocation1], 1
    %v22 = vld [vmem:[%s21] sm:$0x1]
    %23 = vrot.lane.b32.xlu0 %v22, 4
    %v24 = vpop.permute.xlu0 %23
    %vm25 = vcmask 64544
    %26 = vst.msk [vmem:[#allocation0] sm:$0x1] %vm25, %v24
    %s28 = sshllo.u32 0, 1
    %v30 = vld [vmem:[#allocation0] sm:%s28]
    %s31 = sshllo.u32 0, 1
    %32 = vst [vmem:[%s1] sm:%s31] %v30

// kernel: decoder_block_forward.1
$region0: #{decoder_block_forward.1}
  #allocation0 [shape = 'u32[]', space=smem, size = 0x4, offset = 0x4, fixed_abs, tag = 'smem constant byte address 0x4 - core index']
  #allocation1 [shape = 'u32[144,128]{1,0:T(1,128)}', space=vmem, size = 0x12000, scoped, tag = 'internal scratch']
  %s0 = inlined_call_operand.vmem [shape: f32[2,8,8,16], index: 0, kind: input, shape index: {}, may-alias: {0,1}]
  %s1 = inlined_call_operand.vmem [shape: f32[2,8,8,16], index: 1, kind: input, shape index: {}, may-alias: {0,1}]
  %s2 = inlined_call_operand.vmem [shape: f32[16,4], index: 2, kind: input, shape index: {}]
  %s3 = inlined_call_operand.vmem [shape: f32[4,4,16], index: 3, kind: input, shape index: {}]
  %s4 = inlined_call_operand.vmem [shape: f32[16,32], index: 4, kind: input, shape index: {}]
  %s5 = inlined_call_operand.vmem [shape: f32[1,4], index: 5, kind: input, shape index: {}]
  %s6 = inlined_call_operand.vmem [shape: f32[1,4], index: 6, kind: input, shape index: {}]
  %s7 = inlined_call_operand.vmem [shape: f32[1,16], index: 7, kind: input, shape index: {}]
  %s8 = inlined_call_operand.vmem [shape: f32[1,16], index: 8, kind: input, shape index: {}]
  %s9 = inlined_call_operand.vmem [shape: f32[1,32], index: 9, kind: input, shape index: {}]
  %s10 = inlined_call_operand.vmem [shape: f32[1,32], index: 10, kind: input, shape index: {}]
  %s11 = inlined_call_operand.vmem [shape: f32[2,8,8,32], index: 11, kind: output, shape index: {}]
  %s12 = sld [smem:[#allocation0]]
  $region77: #{decoder_block_forward.1} parent=0
    _
  %s14 = ssub.s32 1, %s12
  %s15 = scalar_select 0, %s14, %s12
  loop: start=0, step=1, limit=6
  $region2: #{decoder_block_forward.1} parent=0 // loop_pre_header
    _
  $region3: #{decoder_block_forward.1} parent=0 // loop_header
    %s17 = sphi 0, %s21
    %p18 = scmp.ge.s32.totalorder %s17, 6
    %s24 = sphi 0, %s36
    %s25 = sphi 0, %s32
    %s26 = sphi 0, %s24
    %s27 = sphi 0, %s25
    %s28 = sphi 0, %s26
    %s29 = sphi 0, %s27
    %s41 = sphi 0, %s43
    %s44 = sphi 0, %s41
    %s45 = sphi 0, %s44
    %s61 = sphi 0, %s45
    %s77 = sphi 0, %s79
    %s80 = sphi 0, %s77
    %s81 = sphi 0, %s80
    %s97 = sphi 0, %s81
    %s101 = sphi 0, %s101
    %s103 = sphi 0, %s101
    %s104 = sphi 0, %s103
    %s118 = sphi 0, %s104
    %s122 = sphi 0, %s122
    %s124 = sphi 0, %s122
    %s125 = sphi 0, %s124
    %s139 = sphi 0, %s125
    %s143 = sphi 0, %s143
    %s145 = sphi 0, %s143
    %s146 = sphi 0, %s145
    %s160 = sphi 0, %s146
    %s164 = sphi 0, %s164
    %s166 = sphi 0, %s164
    %s167 = sphi 0, %s166
    %s181 = sphi 0, %s167
    %s185 = sphi 0, %s185
    %s187 = sphi 0, %s185
    %s188 = sphi 0, %s187
    %s202 = sphi 0, %s188
    %s206 = sphi 0, %s206
    %s208 = sphi 0, %s206
    %s209 = sphi 0, %s208
    %s223 = sphi 0, %s209
    %s227 = sphi 0, %s227
    %s229 = sphi 0, %s227
    %s230 = sphi 0, %s229
    %s244 = sphi 0, %s230
    %s248 = sphi 0, %s248
    %s250 = sphi 0, %s248
    %s251 = sphi 0, %s250
    %s265 = sphi 0, %s251
    %s269 = sphi 0, %s269
    %s271 = sphi 0, %s269
    %s272 = sphi 0, %s271
    %s286 = sphi 0, %s272
    %s294 = sphi 0, %s296
    %s297 = sphi 0, %s294
    %s298 = sphi 0, %s297
    %s314 = sphi 0, %s298
  $region4: #{decoder_block_forward.1} parent=0 // loop_header_branch
    %20 = sbr.rel (%p18) target = $region8
  $region5: #{decoder_block_forward.1} parent=0 // loop_body
    %s22 = ssub.s32 %s17, 1
    %s23 = ssub.s32 %s17, 2
    %s30 = sadd.s32 1, %s25
    %p31 = scmp.ge.s32.totalorder %s30, 2
    %s32 = scalar_select %p31, 0, %s30
    %s33 = sadd.s32 1, %s24
    %s34 = scalar_select %p31, %s33, %s24
    %p35 = scmp.ge.s32.totalorder %s34, 2
    %s36 = scalar_select %p35, 0, %s34
    %s37 = ssub.s32 %s24, %s36
    %s38 = ssub.s32 %s25, %s32
    %s39 = sor.u32 %s37, %s38
    %p40 = scmp.eq.s32.totalorder %s39, 0
    %s42 = sadd.s32 %s41, 1
    %s43 = scalar_select %p40, %s41, %s42
    %p46 = pneg %p40
    %p47 = scmp.eq.s32.totalorder %s17, 3
    %p48 = por %p46, %p47
    %p49 = scmp.ne.s32.totalorder %s41, %s44
    %p50 = scmp.eq.s32.totalorder %s17, 0
    %p51 = por %p49, %p50
    %p52 = scmp.ne.s32.totalorder %s41, %s44
    %p53 = scmp.eq.s32.totalorder %s22, 3
    %p54 = por %p52, %p53
    %p55 = scmp.ne.s32.totalorder %s44, %s45
    %p56 = scmp.eq.s32.totalorder %s22, 0
    %p57 = por %p55, %p56
    %p58 = scmp.ne.s32.totalorder %s44, %s45
    %p59 = scmp.eq.s32.totalorder %s23, 3
    %p60 = por %p58, %p59
    %p62 = scmp.ne.s32.totalorder %s45, %s61
    %p63 = scmp.eq.s32.totalorder %s23, 0
    %p64 = por %p62, %p63
    %s65 = sadd.s32 %s25, 1
    %s66 = smul.u32 %s65, 4
    %p67 = scmp.lt.s32.totalorder %s66, 7
    %s68 = scalar_select %p67, %s66, 7
    %s69 = sadd.s32 %s32, 1
    %s70 = smul.u32 %s69, 4
    %p71 = scmp.lt.s32.totalorder %s70, 7
    %s72 = scalar_select %p71, %s70, 7
    %s73 = ssub.s32 %s24, %s36
    %s74 = ssub.s32 %s68, %s72
    %s75 = sor.u32 %s73, %s74
    %p76 = scmp.eq.s32.totalorder %s75, 0
    %s78 = sadd.s32 %s77, 1
    %s79 = scalar_select %p76, %s77, %s78
    %p82 = pneg %p76
    %p83 = scmp.eq.s32.totalorder %s17, 3
    %p84 = por %p82, %p83
    %p85 = scmp.ne.s32.totalorder %s77, %s80
    %p86 = scmp.eq.s32.totalorder %s17, 0
    %p87 = por %p85, %p86
    %p88 = scmp.ne.s32.totalorder %s77, %s80
    %p89 = scmp.eq.s32.totalorder %s22, 3
    %p90 = por %p88, %p89
    %p91 = scmp.ne.s32.totalorder %s80, %s81
    %p92 = scmp.eq.s32.totalorder %s22, 0
    %p93 = por %p91, %p92
    %p94 = scmp.ne.s32.totalorder %s80, %s81
    %p95 = scmp.eq.s32.totalorder %s23, 3
    %p96 = por %p94, %p95
    %p98 = scmp.ne.s32.totalorder %s81, %s97
    %p99 = scmp.eq.s32.totalorder %s23, 0
    %p100 = por %p98, %p99
    %s102 = sadd.s32 %s101, 1
    %p105 = scmp.eq.s32.totalorder %s17, 3
    %p106 = scmp.ne.s32.totalorder %s101, %s103
    %p107 = scmp.eq.s32.totalorder %s17, 0
    %p108 = por %p106, %p107
    %p109 = scmp.ne.s32.totalorder %s101, %s103
    %p110 = scmp.eq.s32.totalorder %s22, 3
    %p111 = por %p109, %p110
    %p112 = scmp.ne.s32.totalorder %s103, %s104
    %p113 = scmp.eq.s32.totalorder %s22, 0
    %p114 = por %p112, %p113
    %p115 = scmp.ne.s32.totalorder %s103, %s104
    %p116 = scmp.eq.s32.totalorder %s23, 3
    %p117 = por %p115, %p116
    %p119 = scmp.ne.s32.totalorder %s104, %s118
    %p120 = scmp.eq.s32.totalorder %s23, 0
    %p121 = por %p119, %p120
    %s123 = sadd.s32 %s122, 1
    %p126 = scmp.eq.s32.totalorder %s17, 3
    %p127 = scmp.ne.s32.totalorder %s122, %s124
    %p128 = scmp.eq.s32.totalorder %s17, 0
    %p129 = por %p127, %p128
    %p130 = scmp.ne.s32.totalorder %s122, %s124
    %p131 = scmp.eq.s32.totalorder %s22, 3
    %p132 = por %p130, %p131
    %p133 = scmp.ne.s32.totalorder %s124, %s125
    %p134 = scmp.eq.s32.totalorder %s22, 0
    %p135 = por %p133, %p134
    %p136 = scmp.ne.s32.totalorder %s124, %s125
    %p137 = scmp.eq.s32.totalorder %s23, 3
    %p138 = por %p136, %p137
    %p140 = scmp.ne.s32.totalorder %s125, %s139
    %p141 = scmp.eq.s32.totalorder %s23, 0
    %p142 = por %p140, %p141
    %s144 = sadd.s32 %s143, 1
    %p147 = scmp.eq.s32.totalorder %s17, 3
    %p148 = scmp.ne.s32.totalorder %s143, %s145
    %p149 = scmp.eq.s32.totalorder %s17, 0
    %p150 = por %p148, %p149
    %p151 = scmp.ne.s32.totalorder %s143, %s145
    %p152 = scmp.eq.s32.totalorder %s22, 3
    %p153 = por %p151, %p152
    %p154 = scmp.ne.s32.totalorder %s145, %s146
    %p155 = scmp.eq.s32.totalorder %s22, 0
    %p156 = por %p154, %p155
    %p157 = scmp.ne.s32.totalorder %s145, %s146
    %p158 = scmp.eq.s32.totalorder %s23, 3
    %p159 = por %p157, %p158
    %p161 = scmp.ne.s32.totalorder %s146, %s160
    %p162 = scmp.eq.s32.totalorder %s23, 0
    %p163 = por %p161, %p162
    %s165 = sadd.s32 %s164, 1
    %p168 = scmp.eq.s32.totalorder %s17, 3
    %p169 = scmp.ne.s32.totalorder %s164, %s166
    %p170 = scmp.eq.s32.totalorder %s17, 0
    %p171 = por %p169, %p170
    %p172 = scmp.ne.s32.totalorder %s164, %s166
    %p173 = scmp.eq.s32.totalorder %s22, 3
    %p174 = por %p172, %p173
    %p175 = scmp.ne.s32.totalorder %s166, %s167
    %p176 = scmp.eq.s32.totalorder %s22, 0
    %p177 = por %p175, %p176
    %p178 = scmp.ne.s32.totalorder %s166, %s167
    %p179 = scmp.eq.s32.totalorder %s23, 3
    %p180 = por %p178, %p179
    %p182 = scmp.ne.s32.totalorder %s167, %s181
    %p183 = scmp.eq.s32.totalorder %s23, 0
    %p184 = por %p182, %p183
    %s186 = sadd.s32 %s185, 1
    %p189 = scmp.eq.s32.totalorder %s17, 3
    %p190 = scmp.ne.s32.totalorder %s185, %s187
    %p191 = scmp.eq.s32.totalorder %s17, 0
    %p192 = por %p190, %p191
    %p193 = scmp.ne.s32.totalorder %s185, %s187
    %p194 = scmp.eq.s32.totalorder %s22, 3
    %p195 = por %p193, %p194
    %p196 = scmp.ne.s32.totalorder %s187, %s188
    %p197 = scmp.eq.s32.totalorder %s22, 0
    %p198 = por %p196, %p197
    %p199 = scmp.ne.s32.totalorder %s187, %s188
    %p200 = scmp.eq.s32.totalorder %s23, 3
    %p201 = por %p199, %p200
    %p203 = scmp.ne.s32.totalorder %s188, %s202
    %p204 = scmp.eq.s32.totalorder %s23, 0
    %p205 = por %p203, %p204
    %s207 = sadd.s32 %s206, 1
    %p210 = scmp.eq.s32.totalorder %s17, 3
    %p211 = scmp.ne.s32.totalorder %s206, %s208
    %p212 = scmp.eq.s32.totalorder %s17, 0
    %p213 = por %p211, %p212
    %p214 = scmp.ne.s32.totalorder %s206, %s208
    %p215 = scmp.eq.s32.totalorder %s22, 3
    %p216 = por %p214, %p215
    %p217 = scmp.ne.s32.totalorder %s208, %s209
    %p218 = scmp.eq.s32.totalorder %s22, 0
    %p219 = por %p217, %p218
    %p220 = scmp.ne.s32.totalorder %s208, %s209
    %p221 = scmp.eq.s32.totalorder %s23, 3
    %p222 = por %p220, %p221
    %p224 = scmp.ne.s32.totalorder %s209, %s223
    %p225 = scmp.eq.s32.totalorder %s23, 0
    %p226 = por %p224, %p225
    %s228 = sadd.s32 %s227, 1
    %p231 = scmp.eq.s32.totalorder %s17, 3
    %p232 = scmp.ne.s32.totalorder %s227, %s229
    %p233 = scmp.eq.s32.totalorder %s17, 0
    %p234 = por %p232, %p233
    %p235 = scmp.ne.s32.totalorder %s227, %s229
    %p236 = scmp.eq.s32.totalorder %s22, 3
    %p237 = por %p235, %p236
    %p238 = scmp.ne.s32.totalorder %s229, %s230
    %p239 = scmp.eq.s32.totalorder %s22, 0
    %p240 = por %p238, %p239
    %p241 = scmp.ne.s32.totalorder %s229, %s230
    %p242 = scmp.eq.s32.totalorder %s23, 3
    %p243 = por %p241, %p242
    %p245 = scmp.ne.s32.totalorder %s230, %s244
    %p246 = scmp.eq.s32.totalorder %s23, 0
    %p247 = por %p245, %p246
    %s249 = sadd.s32 %s248, 1
    %p252 = scmp.eq.s32.totalorder %s17, 3
    %p253 = scmp.ne.s32.totalorder %s248, %s250
    %p254 = scmp.eq.s32.totalorder %s17, 0
    %p255 = por %p253, %p254
    %p256 = scmp.ne.s32.totalorder %s248, %s250
    %p257 = scmp.eq.s32.totalorder %s22, 3
    %p258 = por %p256, %p257
    %p259 = scmp.ne.s32.totalorder %s250, %s251
    %p260 = scmp.eq.s32.totalorder %s22, 0
    %p261 = por %p259, %p260
    %p262 = scmp.ne.s32.totalorder %s250, %s251
    %p263 = scmp.eq.s32.totalorder %s23, 3
    %p264 = por %p262, %p263
    %p266 = scmp.ne.s32.totalorder %s251, %s265
    %p267 = scmp.eq.s32.totalorder %s23, 0
    %p268 = por %p266, %p267
    %s270 = sadd.s32 %s269, 1
    %p273 = scmp.eq.s32.totalorder %s17, 3
    %p274 = scmp.ne.s32.totalorder %s269, %s271
    %p275 = scmp.eq.s32.totalorder %s17, 0
    %p276 = por %p274, %p275
    %p277 = scmp.ne.s32.totalorder %s269, %s271
    %p278 = scmp.eq.s32.totalorder %s22, 3
    %p279 = por %p277, %p278
    %p280 = scmp.ne.s32.totalorder %s271, %s272
    %p281 = scmp.eq.s32.totalorder %s22, 0
    %p282 = por %p280, %p281
    %p283 = scmp.ne.s32.totalorder %s271, %s272
    %p284 = scmp.eq.s32.totalorder %s23, 3
    %p285 = por %p283, %p284
    %p287 = scmp.ne.s32.totalorder %s272, %s286
    %p288 = scmp.eq.s32.totalorder %s23, 0
    %p289 = por %p287, %p288
    %s290 = ssub.s32 %s24, %s36
    %s291 = ssub.s32 %s25, %s32
    %s292 = sor.u32 %s290, %s291
    %p293 = scmp.eq.s32.totalorder %s292, 0
    %s295 = sadd.s32 %s294, 1
    %s296 = scalar_select %p293, %s294, %s295
    %p299 = pneg %p293
    %p300 = scmp.eq.s32.totalorder %s17, 3
    %p301 = por %p299, %p300
    %p302 = scmp.ne.s32.totalorder %s294, %s297
    %p303 = scmp.eq.s32.totalorder %s17, 0
    %p304 = por %p302, %p303
    %p305 = scmp.ne.s32.totalorder %s294, %s297
    %p306 = scmp.eq.s32.totalorder %s22, 3
    %p307 = por %p305, %p306
    %p308 = scmp.ne.s32.totalorder %s297, %s298
    %p309 = scmp.eq.s32.totalorder %s22, 0
    %p310 = por %p308, %p309
    %p311 = scmp.ne.s32.totalorder %s297, %s298
    %p312 = scmp.eq.s32.totalorder %s23, 3
    %p313 = por %p311, %p312
    %p315 = scmp.ne.s32.totalorder %s298, %s314
    %p316 = scmp.eq.s32.totalorder %s23, 0
    %p317 = por %p315, %p316
    %p318 = scmp.le.s32.totalorder 1, %s17
    %p319 = scmp.lt.s32.totalorder %s17, 5
    %p320 = pnand %p318, %p319
    %p321 = pneg %p320
    // Predicated region
    $region9: #{decoder_block_forward.1} parent=5 // pred_check
      _
    $region10: #{decoder_block_forward.1} parent=5 // pred_check_branch
      %323 = sbr.rel (%p320) target = $region12
    $region11: #{decoder_block_forward.1} parent=5 // pred_region
      %s324 = ssub.s32 %s17, 1
      // Predicated region
      $region13: #{decoder_block_forward.1} parent=11 // pred_check
        %p325 = pneg %p114
      $region14: #{decoder_block_forward.1} parent=11 // pred_check_branch
        %327 = sbr.rel (%p325) target = $region16
      $region15: #{decoder_block_forward.1} parent=11 // pred_region
        _
      $region16: #{decoder_block_forward.1} parent=11 // pred_fallthru
        _
      // Predicated region
      $region17: #{decoder_block_forward.1} parent=11 // pred_check
        %p328 = pneg %p135
      $region18: #{decoder_block_forward.1} parent=11 // pred_check_branch
        %330 = sbr.rel (%p328) target = $region20
      $region19: #{decoder_block_forward.1} parent=11 // pred_region
        _
      $region20: #{decoder_block_forward.1} parent=11 // pred_fallthru
        _
      // Predicated region
      $region21: #{decoder_block_forward.1} parent=11 // pred_check
        %p331 = pneg %p156
      $region22: #{decoder_block_forward.1} parent=11 // pred_check_branch
        %333 = sbr.rel (%p331) target = $region24
      $region23: #{decoder_block_forward.1} parent=11 // pred_region
        _
      $region24: #{decoder_block_forward.1} parent=11 // pred_fallthru
        _
      // Predicated region
      $region25: #{decoder_block_forward.1} parent=11 // pred_check
        %p334 = pneg %p177
      $region26: #{decoder_block_forward.1} parent=11 // pred_check_branch
        %336 = sbr.rel (%p334) target = $region28
      $region27: #{decoder_block_forward.1} parent=11 // pred_region
        _
      $region28: #{decoder_block_forward.1} parent=11 // pred_fallthru
        _
      // Predicated region
      $region29: #{decoder_block_forward.1} parent=11 // pred_check
        %p337 = pneg %p198
      $region30: #{decoder_block_forward.1} parent=11 // pred_check_branch
        %339 = sbr.rel (%p337) target = $region32
      $region31: #{decoder_block_forward.1} parent=11 // pred_region
        _
      $region32: #{decoder_block_forward.1} parent=11 // pred_fallthru
        _
      // Predicated region
      $region33: #{decoder_block_forward.1} parent=11 // pred_check
        %p340 = pneg %p219
      $region34: #{decoder_block_forward.1} parent=11 // pred_check_branch
        %342 = sbr.rel (%p340) target = $region36
      $region35: #{decoder_block_forward.1} parent=11 // pred_region
        _
      $region36: #{decoder_block_forward.1} parent=11 // pred_fallthru
        _
      // Predicated region
      $region37: #{decoder_block_forward.1} parent=11 // pred_check
        %p343 = pneg %p240
      $region38: #{decoder_block_forward.1} parent=11 // pred_check_branch
        %345 = sbr.rel (%p343) target = $region40
      $region39: #{decoder_block_forward.1} parent=11 // pred_region
        _
      $region40: #{decoder_block_forward.1} parent=11 // pred_fallthru
        _
      // Predicated region
      $region41: #{decoder_block_forward.1} parent=11 // pred_check
        %p346 = pneg %p261
      $region42: #{decoder_block_forward.1} parent=11 // pred_check_branch
        %348 = sbr.rel (%p346) target = $region44
      $region43: #{decoder_block_forward.1} parent=11 // pred_region
        _
      $region44: #{decoder_block_forward.1} parent=11 // pred_fallthru
        _
      // Predicated region
      $region45: #{decoder_block_forward.1} parent=11 // pred_check
        %p349 = pneg %p282
      $region46: #{decoder_block_forward.1} parent=11 // pred_check_branch
        %351 = sbr.rel (%p349) target = $region48
      $region47: #{decoder_block_forward.1} parent=11 // pred_region
        _
      $region48: #{decoder_block_forward.1} parent=11 // pred_fallthru
        _
    $region12: #{decoder_block_forward.1} parent=5 // pred_fallthru
      _
    %p352 = scmp.lt.s32.totalorder %s17, 4
    // Predicated region
    $region49: #{decoder_block_forward.1} parent=5 // pred_check
      %p353 = pneg %p352
    $region50: #{decoder_block_forward.1} parent=5 // pred_check_branch
      %355 = sbr.rel (%p353) target = $region52
    $region51: #{decoder_block_forward.1} parent=5 // pred_region
      // Predicated region
      $region53: #{decoder_block_forward.1} parent=51 // pred_check
        %p356 = pneg %p51
      $region54: #{decoder_block_forward.1} parent=51 // pred_check_branch
        %358 = sbr.rel (%p356) target = $region56
      $region55: #{decoder_block_forward.1} parent=51 // pred_region
        %s359 = smul.u32 4, %s25
        %p360 = scmp.lt.s32.totalorder %s24, 1
        %s361 = scalar_select %p360, %s24, 1
        %p362 = scmp.lt.s32.totalorder %s359, 7
        %s363 = scalar_select %p362, %s359, 7
        %s364 = smul.addr %s361, 8
        %s365 = sadd.s32 %s363, %s364
        %s366 = smul.addr %s365, 8
        %s367 = scalar_lea.vmem %s0, %s366
        %s368 = smul.u32 4, %s25
      $region56: #{decoder_block_forward.1} parent=51 // pred_fallthru
        _
      // Predicated region
      $region57: #{decoder_block_forward.1} parent=51 // pred_check
        %p369 = pneg %p87
      $region58: #{decoder_block_forward.1} parent=51 // pred_check_branch
        %371 = sbr.rel (%p369) target = $region60
      $region59: #{decoder_block_forward.1} parent=51 // pred_region
        %s372 = sadd.s32 %s25, 1
        %s373 = smul.u32 %s372, 4
        %p374 = scmp.lt.s32.totalorder %s373, 7
        %s375 = scalar_select %p374, %s373, 7
        %p376 = scmp.lt.s32.totalorder %s24, 1
        %s377 = scalar_select %p376, %s24, 1
        %p378 = scmp.lt.s32.totalorder %s375, 7
        %s379 = scalar_select %p378, %s375, 7
        %s380 = smul.addr %s377, 8
        %s381 = sadd.s32 %s379, %s380
        %s382 = smul.addr %s381, 8
        %s383 = scalar_lea.vmem %s1, %s382
        %s384 = sadd.s32 %s25, 1
        %s385 = smul.u32 %s384, 4
        %p386 = scmp.lt.s32.totalorder %s385, 7
        %s387 = scalar_select %p386, %s385, 7
      $region60: #{decoder_block_forward.1} parent=51 // pred_fallthru
        _
    $region52: #{decoder_block_forward.1} parent=5 // pred_fallthru
      _
    %p388 = scmp.le.s32.totalorder 1, %s17
    %p389 = scmp.lt.s32.totalorder %s17, 5
    %p390 = pnand %p388, %p389
    %p391 = pneg %p390
    // Predicated region
    $region61: #{decoder_block_forward.1} parent=5 // pred_check
      _
    $region62: #{decoder_block_forward.1} parent=5 // pred_check_branch
      %393 = sbr.rel (%p390) target = $region64
    $region63: #{decoder_block_forward.1} parent=5 // pred_region
      %s394 = ssub.s32 %s17, 1
      %s395 = smul.u32 4, %s27
      %p396 = scmp.lt.s32.totalorder %s26, 1
      %s397 = scalar_select %p396, %s26, 1
      %p398 = scmp.lt.s32.totalorder %s395, 7
      %s399 = scalar_select %p398, %s395, 7
      %s400 = smul.addr %s397, 8
      %s401 = sadd.s32 %s399, %s400
      %s402 = smul.addr %s401, 8
      %s403 = scalar_lea.vmem %s0, %s402
      %p404 = pneg %p57
      %p405 = pneg %p54
      %s406 = sadd.s32 %s27, 1
      %s407 = smul.u32 %s406, 4
      %p408 = scmp.lt.s32.totalorder %s407, 7
      %s409 = scalar_select %p408, %s407, 7
      %p410 = scmp.lt.s32.totalorder %s26, 1
      %s411 = scalar_select %p410, %s26, 1
      %p412 = scmp.lt.s32.totalorder %s409, 7
      %s413 = scalar_select %p412, %s409, 7
      %s414 = smul.addr %s411, 8
      %s415 = sadd.s32 %s413, %s414
      %s416 = smul.addr %s415, 8
      %s417 = scalar_lea.vmem %s1, %s416
      %p418 = pneg %p93
      %p419 = pneg %p90
      %p420 = pneg %p114
      %p421 = pneg %p111
      %p422 = pneg %p135
      %p423 = pneg %p132
      %p424 = pneg %p156
      %p425 = pneg %p153
      %p426 = pneg %p177
      %p427 = pneg %p174
      %p428 = pneg %p198
      %p429 = pneg %p195
      %p430 = pneg %p219
      %p431 = pneg %p216
      %p432 = pneg %p240
      %p433 = pneg %p237
      %p434 = pneg %p261
      %p435 = pneg %p258
      %p436 = pneg %p282
      %p437 = pneg %p279
      %p438 = pneg %p310
      %p439 = pneg %p307
      %s440 = smul.u32 4, %s27
      %p441 = scmp.lt.s32.totalorder %s26, 1
      %s442 = scalar_select %p441, %s26, 1
      %p443 = scmp.lt.s32.totalorder %s440, 7
      %s444 = scalar_select %p443, %s440, 7
      %s445 = smul.addr %s442, 8
      %s446 = sadd.s32 %s444, %s445
      %s447 = smul.addr %s446, 8
      %s448 = scalar_lea.vmem %s11, %s447
      %s449 = smul.u32 4, %s27
      %p450 = scmp.lt.s32.totalorder %s26, 1
      %s451 = scalar_select %p450, %s26, 1
      %p452 = scmp.lt.s32.totalorder %s449, 7
      %s453 = scalar_select %p452, %s449, 7
      %s454 = smul.addr %s451, 8
      %s455 = sadd.s32 %s453, %s454
      %s456 = smul.addr %s455, 8
      %s457 = scalar_lea.vmem %s0, %s456
      %s458 = smul.u32 4, %s27
      %s459 = sadd.s32 %s27, 1
      %s460 = smul.u32 %s459, 4
      %p461 = scmp.lt.s32.totalorder %s460, 7
      %s462 = scalar_select %p461, %s460, 7
      %p463 = scmp.lt.s32.totalorder %s26, 1
      %s464 = scalar_select %p463, %s26, 1
      %p465 = scmp.lt.s32.totalorder %s462, 7
      %s466 = scalar_select %p465, %s462, 7
      %s467 = smul.addr %s464, 8
      %s468 = sadd.s32 %s466, %s467
      %s469 = smul.addr %s468, 8
      %s470 = scalar_lea.vmem %s1, %s469
      %s471 = sadd.s32 %s27, 1
      %s472 = smul.u32 %s471, 4
      %p473 = scmp.lt.s32.totalorder %s472, 7
      %s474 = scalar_select %p473, %s472, 7
      %s475 = smul.u32 4, %s27
      %p476 = scmp.lt.s32.totalorder %s26, 1
      %s477 = scalar_select %p476, %s26, 1
      %p478 = scmp.lt.s32.totalorder %s475, 7
      %s479 = scalar_select %p478, %s475, 7
      %s480 = smul.addr %s477, 8
      %s481 = sadd.s32 %s479, %s480
      %s482 = smul.addr %s481, 8
      %s483 = scalar_lea.vmem %s11, %s482
      %s484 = smul.u32 4, %s27
      %v485 = vld [vmem:[%s457] sm:$0xff]
      %v486 = vld [vmem:[%s457 + $0x8] sm:$0xff]
      %v487 = vld [vmem:[%s457 + $0x10] sm:$0xff]
      %v488 = vld [vmem:[%s457 + $0x18] sm:$0xff]
      %v489 = vld [vmem:[%s2] sm:$0xff]
      %v490 = vld [vmem:[%s2 + $0x8] sm:$0xff]
      %vm491 = vcmask 130048
      %v493 = vsel %vm491, %v485, 0
      %v496 = vsel %vm491, %v486, 0
      %v499 = vsel %vm491, %v487, 0
      %v502 = vsel %vm491, %v488, 0
      %504 = vmatprep.subr.mxu0 0.0
      %505 = vmatpush1.msra.mxu0 %v489
      %506 = vmatprep.subr.mxu0 0.0
      %507 = vmatpush1.msra.mxu0 %v490
      %508 = vmatprep.subr.mxu0 0.0
      %509 = vmatpush1.msra.mxu0 0.0
      %510 = vmatprep.subr.mxu0 0.0
      %511 = vmatpush1.msra.mxu0 0.0
      %512 = vmatprep.subr.mxu0 0.0
      %513 = vmatpush1.msra.mxu0 0.0
      %514 = vmatprep.subr.mxu0 0.0
      %515 = vmatpush1.msra.mxu0 0.0
      %516 = vmatprep.subr.mxu0 0.0
      %517 = vmatpush1.msra.mxu0 0.0
      %518 = vmatprep.subr.mxu0 0.0
      %519 = vmatpush1.msra.mxu0 0.0
      %520 = vmatprep.subr.mxu0 0.0
      %521 = vmatpush1.msra.mxu0 0.0
      %522 = vmatprep.subr.mxu0 0.0
      %523 = vmatpush1.msra.mxu0 0.0
      %524 = vmatprep.subr.mxu0 0.0
      %525 = vmatpush1.msra.mxu0 0.0
      %526 = vmatprep.subr.mxu0 0.0
      %527 = vmatpush1.msra.mxu0 0.0
      %528 = vmatprep.subr.mxu0 0.0
      %529 = vmatpush1.msra.mxu0 0.0
      %530 = vmatprep.subr.mxu0 0.0
      %531 = vmatpush1.msra.mxu0 0.0
      %532 = vmatprep.subr.mxu0 0.0
      %533 = vmatpush1.msra.mxu0 0.0
      %534 = vmatprep.subr.mxu0 0.0
      %535 = vmatpush1.msra.mxu0 0.0
      %536 = vmatprep.subr.mxu0 0.0
      %537 = vmatpush1.msra.mxu0 0.0
      %538 = vmatprep.subr.mxu0 0.0
      %539 = vmatpush1.msra.mxu0 0.0
      %540 = vmatprep.subr.mxu0 0.0
      %541 = vmatpush1.msra.mxu0 0.0
      %542 = vmatprep.subr.mxu0 0.0
      %543 = vmatpush1.msra.mxu0 0.0
      %544 = vmatprep.subr.mxu0 0.0
      %545 = vmatpush1.msra.mxu0 0.0
      %546 = vmatprep.subr.mxu0 0.0
      %547 = vmatpush1.msra.mxu0 0.0
      %548 = vmatprep.subr.mxu0 0.0
      %549 = vmatpush1.msra.mxu0 0.0
      %550 = vmatprep.subr.mxu0 0.0
      %551 = vmatpush1.msra.mxu0 0.0
      %552 = vmatprep.subr.mxu0 0.0
      %553 = vmatpush1.msra.mxu0 0.0
      %554 = vmatprep.subr.mxu0 0.0
      %555 = vmatpush1.msra.mxu0 0.0
      %556 = vmatprep.subr.mxu0 0.0
      %557 = vmatpush1.msra.mxu0 0.0
      %558 = vmatprep.subr.mxu0 0.0
      %559 = vmatpush1.msra.mxu0 0.0
      %560 = vmatprep.subr.mxu0 0.0
      %561 = vmatpush1.msra.mxu0 0.0
      %562 = vmatprep.subr.mxu0 0.0
      %563 = vmatpush1.msra.mxu0 0.0
      %564 = vmatprep.subr.mxu0 0.0
      %565 = vmatpush1.msra.mxu0 0.0
      %566 = vmatprep.subr.mxu0 0.0
      %567 = vmatpush1.msra.mxu0 0.0
      %568 = vmatprep.mubr.f32.mxu0 0.0
      %569 = vmatmul.mubr.f32.gmra.mrb[0].mxu0 %v493
      %v570 = vpop.f32.mrb[0].mxu0
      %v571 = vadd.f32 0.0, %v570
      %v572 = vpop.f32.mrb[0].mxu0
      %573 = vmatprep.mubr.f32.mxu0 0.0
      %574 = vmatmul.mubr.f32.gmra.mrb[0].mxu0 %v496
      %v575 = vpop.f32.mrb[0].mxu0
      %v576 = vadd.f32 0.0, %v575
      %v577 = vpop.f32.mrb[0].mxu0
      %578 = vmatprep.mubr.f32.mxu0 0.0
      %579 = vmatmul.mubr.f32.gmra.mrb[0].mxu0 %v499
      %v580 = vpop.f32.mrb[0].mxu0
      %v581 = vadd.f32 0.0, %v580
      %v582 = vpop.f32.mrb[0].mxu0
      %583 = vmatprep.mubr.f32.mxu0 0.0
      %584 = vmatmul.mubr.f32.gmra.mrb[0].mxu0 %v502
      %v585 = vpop.f32.mrb[0].mxu0
      %v586 = vadd.f32 0.0, %v585
      %v587 = vpop.f32.mrb[0].mxu0
      %588 = vdwg.mxu0
      %v589 = vld [vmem:[%s5] sm:$0x1]
      %v591 = vlaneseq
      %v592 = vshrl.u32 %v591, 7
      %v593 = vsub.s32 0, %v592
      %v594 = vrot.slane %v589, %v593
      %v596 = vmul.f32 %v571, %v594
      %v597 = vmul.f32 %v576, %v594
      %v598 = vmul.f32 %v581, %v594
      %v599 = vmul.f32 %v586, %v594
      %v600 = vld [vmem:[%s6] sm:$0x1]
      %v602 = vlaneseq
      %v603 = vshrl.u32 %v602, 7
      %v604 = vsub.s32 0, %v603
      %v605 = vrot.slane %v600, %v604
      %v607 = vadd.f32 %v596, %v605
      %v608 = vadd.f32 %v597, %v605
      %v609 = vadd.f32 %v598, %v605
      %v610 = vadd.f32 %v599, %v605
      %v611 = vmax.f32 %v607, 0.0
      %v612 = vmax.f32 %v608, 0.0
      %v613 = vmax.f32 %v609, 0.0
      %v614 = vmax.f32 %v610, 0.0
      %p615 = scmp.eq.s32.totalorder %s27, 1
      %s616 = scalar_select %p615, 0.0, 1.0
      %v617 = vld [vmem:[%s470] sm:$0xff]
      %v619 = vsel %vm491, %v617, 0
      %621 = vmatprep.subr.mxu0 0.0
      %622 = vmatpush1.msra.mxu0 %v489
      %623 = vmatprep.subr.mxu0 0.0
      %624 = vmatpush1.msra.mxu0 %v490
      %625 = vmatprep.subr.mxu0 0.0
      %626 = vmatpush1.msra.mxu0 0.0
      %627 = vmatprep.subr.mxu0 0.0
      %628 = vmatpush1.msra.mxu0 0.0
      %629 = vmatprep.subr.mxu0 0.0
      %630 = vmatpush1.msra.mxu0 0.0
      %631 = vmatprep.subr.mxu0 0.0
      %632 = vmatpush1.msra.mxu0 0.0
      %633 = vmatprep.subr.mxu0 0.0
      %634 = vmatpush1.msra.mxu0 0.0
      %635 = vmatprep.subr.mxu0 0.0
      %636 = vmatpush1.msra.mxu0 0.0
      %637 = vmatprep.subr.mxu0 0.0
      %638 = vmatpush1.msra.mxu0 0.0
      %639 = vmatprep.subr.mxu0 0.0
      %640 = vmatpush1.msra.mxu0 0.0
      %641 = vmatprep.subr.mxu0 0.0
      %642 = vmatpush1.msra.mxu0 0.0
      %643 = vmatprep.subr.mxu0 0.0
      %644 = vmatpush1.msra.mxu0 0.0
      %645 = vmatprep.subr.mxu0 0.0
      %646 = vmatpush1.msra.mxu0 0.0
      %647 = vmatprep.subr.mxu0 0.0
      %648 = vmatpush1.msra.mxu0 0.0
      %649 = vmatprep.subr.mxu0 0.0
      %650 = vmatpush1.msra.mxu0 0.0
      %651 = vmatprep.subr.mxu0 0.0
      %652 = vmatpush1.msra.mxu0 0.0
      %653 = vmatprep.subr.mxu0 0.0
      %654 = vmatpush1.msra.mxu0 0.0
      %655 = vmatprep.subr.mxu0 0.0
      %656 = vmatpush1.msra.mxu0 0.0
      %657 = vmatprep.subr.mxu0 0.0
      %658 = vmatpush1.msra.mxu0 0.0
      %659 = vmatprep.subr.mxu0 0.0
      %660 = vmatpush1.msra.mxu0 0.0
      %661 = vmatprep.subr.mxu0 0.0
      %662 = vmatpush1.msra.mxu0 0.0
      %663 = vmatprep.subr.mxu0 0.0
      %664 = vmatpush1.msra.mxu0 0.0
      %665 = vmatprep.subr.mxu0 0.0
      %666 = vmatpush1.msra.mxu0 0.0
      %667 = vmatprep.subr.mxu0 0.0
      %668 = vmatpush1.msra.mxu0 0.0
      %669 = vmatprep.subr.mxu0 0.0
      %670 = vmatpush1.msra.mxu0 0.0
      %671 = vmatprep.subr.mxu0 0.0
      %672 = vmatpush1.msra.mxu0 0.0
      %673 = vmatprep.subr.mxu0 0.0
      %674 = vmatpush1.msra.mxu0 0.0
      %675 = vmatprep.subr.mxu0 0.0
      %676 = vmatpush1.msra.mxu0 0.0
      %677 = vmatprep.subr.mxu0 0.0
      %678 = vmatpush1.msra.mxu0 0.0
      %679 = vmatprep.subr.mxu0 0.0
      %680 = vmatpush1.msra.mxu0 0.0
      %681 = vmatprep.subr.mxu0 0.0
      %682 = vmatpush1.msra.mxu0 0.0
      %683 = vmatprep.subr.mxu0 0.0
      %684 = vmatpush1.msra.mxu0 0.0
      %685 = vmatprep.mubr.f32.mxu0 0.0
      %686 = vmatmul.mubr.f32.gmra.mrb[0].mxu0 %v619
      %v687 = vpop.f32.mrb[0].mxu0
      %v688 = vadd.f32 0.0, %v687
      %v689 = vpop.f32.mrb[0].mxu0
      %690 = vdwg.mxu0
      %v691 = vmul.f32 %v688, %v594
      %v692 = vadd.f32 %v691, %v605
      %v693 = vmax.f32 %v692, 0.0
      %v694 = vstv %s616
      %v695 = vmul.f32 %v693, %v694
      %v700 = vrot.slane %v611, 1
      %v701 = vrot.slane %v612, 1
      %v702 = vrot.slane %v613, 1
      %v703 = vrot.slane %v614, 1
      %vm708 = vcmask 1046528
      %v709 = vsel %vm708, %v700, 0.0
      %v710 = vsel %vm708, %v701, 0.0
      %v711 = vsel %vm708, %v702, 0.0
      %v712 = vsel %vm708, %v703, 0.0
      %v714 = vrot.slane %v695, 1
      %v716 = vsel %vm708, %v714, 0.0
      %v717 = vld [vmem:[%s3] sm:$0xf]
      %s718 = scalar_lea.vmem %s3, 4
      %v719 = vld [vmem:[%s718] sm:$0xf]
      %vm720 = vcmask 31744
      %v722 = vsel %vm720, %v709, 0
      %v725 = vsel %vm720, %v710, 0
      %v728 = vsel %vm720, %v711, 0
      %v731 = vsel %vm720, %v712, 0
      %vm733 = vcmask 1043456
      %v735 = vsel %vm733, %v719, 0
      %737 = vmatprep.subr.mxu0 0.0
      %738 = vmatpush1.msra.mxu0 %v735
      %739 = vmatprep.subr.mxu0 0.0
      %740 = vmatpush1.msra.mxu0 0.0
      %741 = vmatprep.subr.mxu0 0.0
      %742 = vmatpush1.msra.mxu0 0.0
      %743 = vmatprep.subr.mxu0 0.0
      %744 = vmatpush1.msra.mxu0 0.0
      %745 = vmatprep.subr.mxu0 0.0
      %746 = vmatpush1.msra.mxu0 0.0
      %747 = vmatprep.subr.mxu0 0.0
      %748 = vmatpush1.msra.mxu0 0.0
      %749 = vmatprep.subr.mxu0 0.0
      %750 = vmatpush1.msra.mxu0 0.0
      %751 = vmatprep.subr.mxu0 0.0
      %752 = vmatpush1.msra.mxu0 0.0
      %753 = vmatprep.subr.mxu0 0.0
      %754 = vmatpush1.msra.mxu0 0.0
      %755 = vmatprep.subr.mxu0 0.0
      %756 = vmatpush1.msra.mxu0 0.0
      %757 = vmatprep.subr.mxu0 0.0
      %758 = vmatpush1.msra.mxu0 0.0
      %759 = vmatprep.subr.mxu0 0.0
      %760 = vmatpush1.msra.mxu0 0.0
      %761 = vmatprep.subr.mxu0 0.0
      %762 = vmatpush1.msra.mxu0 0.0
      %763 = vmatprep.subr.mxu0 0.0
      %764 = vmatpush1.msra.mxu0 0.0
      %765 = vmatprep.subr.mxu0 0.0
      %766 = vmatpush1.msra.mxu0 0.0
      %767 = vmatprep.subr.mxu0 0.0
      %768 = vmatpush1.msra.mxu0 0.0
      %769 = vmatprep.subr.mxu0 0.0
      %770 = vmatpush1.msra.mxu0 0.0
      %771 = vmatprep.subr.mxu0 0.0
      %772 = vmatpush1.msra.mxu0 0.0
      %773 = vmatprep.subr.mxu0 0.0
      %774 = vmatpush1.msra.mxu0 0.0
      %775 = vmatprep.subr.mxu0 0.0
      %776 = vmatpush1.msra.mxu0 0.0
      %777 = vmatprep.subr.mxu0 0.0
      %778 = vmatpush1.msra.mxu0 0.0
      %779 = vmatprep.subr.mxu0 0.0
      %780 = vmatpush1.msra.mxu0 0.0
      %781 = vmatprep.subr.mxu0 0.0
      %782 = vmatpush1.msra.mxu0 0.0
      %783 = vmatprep.subr.mxu0 0.0
      %784 = vmatpush1.msra.mxu0 0.0
      %785 = vmatprep.subr.mxu0 0.0
      %786 = vmatpush1.msra.mxu0 0.0
      %787 = vmatprep.subr.mxu0 0.0
      %788 = vmatpush1.msra.mxu0 0.0
      %789 = vmatprep.subr.mxu0 0.0
      %790 = vmatpush1.msra.mxu0 0.0
      %791 = vmatprep.subr.mxu0 0.0
      %792 = vmatpush1.msra.mxu0 0.0
      %793 = vmatprep.subr.mxu0 0.0
      %794 = vmatpush1.msra.mxu0 0.0
      %795 = vmatprep.subr.mxu0 0.0
      %796 = vmatpush1.msra.mxu0 0.0
      %797 = vmatprep.subr.mxu0 0.0
      %798 = vmatpush1.msra.mxu0 0.0
      %799 = vmatprep.subr.mxu0 0.0
      %800 = vmatpush1.msra.mxu0 0.0
      %801 = vmatprep.mubr.f32.mxu0 0.0
      %802 = vmatmul.mubr.f32.gmra.mrb[0].mxu0 %v722
      %v803 = vpop.f32.mrb[0].mxu0
      %v804 = vadd.f32 0.0, %v803
      %v805 = vpop.f32.mrb[0].mxu0
      %806 = vmatprep.mubr.f32.mxu0 0.0
      %807 = vmatmul.mubr.f32.gmra.mrb[0].mxu0 %v725
      %v808 = vpop.f32.mrb[0].mxu0
      %v809 = vadd.f32 0.0, %v808
      %v810 = vpop.f32.mrb[0].mxu0
      %811 = vmatprep.mubr.f32.mxu0 0.0
      %812 = vmatmul.mubr.f32.gmra.mrb[0].mxu0 %v728
      %v813 = vpop.f32.mrb[0].mxu0
      %v814 = vadd.f32 0.0, %v813
      %v815 = vpop.f32.mrb[0].mxu0
      %816 = vmatprep.mubr.f32.mxu0 0.0
      %817 = vmatmul.mubr.f32.gmra.mrb[0].mxu0 %v731
      %v818 = vpop.f32.mrb[0].mxu0
      %v819 = vadd.f32 0.0, %v818
      %v820 = vpop.f32.mrb[0].mxu0
      %821 = vdwg.mxu0
      %v822 = vsel %vm720, %v611, 0
      %v824 = vsel %vm720, %v612, 0
      %v826 = vsel %vm720, %v613, 0
      %v828 = vsel %vm720, %v614, 0
      %v831 = vsel %vm733, %v717, 0
      %833 = vmatprep.subr.mxu0 0.0
      %834 = vmatpush1.msra.mxu0 %v831
      %835 = vmatprep.subr.mxu0 0.0
      %836 = vmatpush1.msra.mxu0 0.0
      %837 = vmatprep.subr.mxu0 0.0
      %838 = vmatpush1.msra.mxu0 0.0
      %839 = vmatprep.subr.mxu0 0.0
      %840 = vmatpush1.msra.mxu0 0.0
      %841 = vmatprep.subr.mxu0 0.0
      %842 = vmatpush1.msra.mxu0 0.0
      %843 = vmatprep.subr.mxu0 0.0
      %844 = vmatpush1.msra.mxu0 0.0
      %845 = vmatprep.subr.mxu0 0.0
      %846 = vmatpush1.msra.mxu0 0.0
      %847 = vmatprep.subr.mxu0 0.0
      %848 = vmatpush1.msra.mxu0 0.0
      %849 = vmatprep.subr.mxu0 0.0
      %850 = vmatpush1.msra.mxu0 0.0
      %851 = vmatprep.subr.mxu0 0.0
      %852 = vmatpush1.msra.mxu0 0.0
      %853 = vmatprep.subr.mxu0 0.0
      %854 = vmatpush1.msra.mxu0 0.0
      %855 = vmatprep.subr.mxu0 0.0
      %856 = vmatpush1.msra.mxu0 0.0
      %857 = vmatprep.subr.mxu0 0.0
      %858 = vmatpush1.msra.mxu0 0.0
      %859 = vmatprep.subr.mxu0 0.0
      %860 = vmatpush1.msra.mxu0 0.0
      %861 = vmatprep.subr.mxu0 0.0
      %862 = vmatpush1.msra.mxu0 0.0
      %863 = vmatprep.subr.mxu0 0.0
      %864 = vmatpush1.msra.mxu0 0.0
      %865 = vmatprep.subr.mxu0 0.0
      %866 = vmatpush1.msra.mxu0 0.0
      %867 = vmatprep.subr.mxu0 0.0
      %868 = vmatpush1.msra.mxu0 0.0
      %869 = vmatprep.subr.mxu0 0.0
      %870 = vmatpush1.msra.mxu0 0.0
      %871 = vmatprep.subr.mxu0 0.0
      %872 = vmatpush1.msra.mxu0 0.0
      %873 = vmatprep.subr.mxu0 0.0
      %874 = vmatpush1.msra.mxu0 0.0
      %875 = vmatprep.subr.mxu0 0.0
      %876 = vmatpush1.msra.mxu0 0.0
      %877 = vmatprep.subr.mxu0 0.0
      %878 = vmatpush1.msra.mxu0 0.0
      %879 = vmatprep.subr.mxu0 0.0
      %880 = vmatpush1.msra.mxu0 0.0
      %881 = vmatprep.subr.mxu0 0.0
      %882 = vmatpush1.msra.mxu0 0.0
      %883 = vmatprep.subr.mxu0 0.0
      %884 = vmatpush1.msra.mxu0 0.0
      %885 = vmatprep.subr.mxu0 0.0
      %886 = vmatpush1.msra.mxu0 0.0
      %887 = vmatprep.subr.mxu0 0.0
      %888 = vmatpush1.msra.mxu0 0.0
      %889 = vmatprep.subr.mxu0 0.0
      %890 = vmatpush1.msra.mxu0 0.0
      %891 = vmatprep.subr.mxu0 0.0
      %892 = vmatpush1.msra.mxu0 0.0
      %893 = vmatprep.subr.mxu0 0.0
      %894 = vmatpush1.msra.mxu0 0.0
      %895 = vmatprep.subr.mxu0 0.0
      %896 = vmatpush1.msra.mxu0 0.0
      %897 = vmatprep.mubr.f32.mxu0 0.0
      %898 = vmatmul.mubr.f32.gmra.mrb[0].mxu0 %v822
      %v899 = vpop.f32.mrb[0].mxu0
      %v900 = vadd.f32 %v804, %v899
      %v901 = vpop.f32.mrb[0].mxu0
      %902 = vmatprep.mubr.f32.mxu0 0.0
      %903 = vmatmul.mubr.f32.gmra.mrb[0].mxu0 %v824
      %v904 = vpop.f32.mrb[0].mxu0
      %v905 = vadd.f32 %v809, %v904
      %v906 = vpop.f32.mrb[0].mxu0
      %907 = vmatprep.mubr.f32.mxu0 0.0
      %908 = vmatmul.mubr.f32.gmra.mrb[0].mxu0 %v826
      %v909 = vpop.f32.mrb[0].mxu0
      %v910 = vadd.f32 %v814, %v909
      %v911 = vpop.f32.mrb[0].mxu0
      %912 = vmatprep.mubr.f32.mxu0 0.0
      %913 = vmatmul.mubr.f32.gmra.mrb[0].mxu0 %v828
      %v914 = vpop.f32.mrb[0].mxu0
      %v915 = vadd.f32 %v819, %v914
      %v916 = vpop.f32.mrb[0].mxu0
      %917 = vdwg.mxu0
      %s918 = scalar_lea.vmem %s3, 8
      %v919 = vld [vmem:[%s918] sm:$0xf]
      %v920 = vsel %vm720, %v695, 0
      %v923 = vsel %vm733, %v919, 0
      %925 = vmatprep.subr.mxu0 0.0
      %926 = vmatpush1.msra.mxu0 %v923
      %927 = vmatprep.subr.mxu0 0.0
      %928 = vmatpush1.msra.mxu0 0.0
      %929 = vmatprep.subr.mxu0 0.0
      %930 = vmatpush1.msra.mxu0 0.0
      %931 = vmatprep.subr.mxu0 0.0
      %932 = vmatpush1.msra.mxu0 0.0
      %933 = vmatprep.subr.mxu0 0.0
      %934 = vmatpush1.msra.mxu0 0.0
      %935 = vmatprep.subr.mxu0 0.0
      %936 = vmatpush1.msra.mxu0 0.0
      %937 = vmatprep.subr.mxu0 0.0
      %938 = vmatpush1.msra.mxu0 0.0
      %939 = vmatprep.subr.mxu0 0.0
      %940 = vmatpush1.msra.mxu0 0.0
      %941 = vmatprep.subr.mxu0 0.0
      %942 = vmatpush1.msra.mxu0 0.0
      %943 = vmatprep.subr.mxu0 0.0
      %944 = vmatpush1.msra.mxu0 0.0
      %945 = vmatprep.subr.mxu0 0.0
      %946 = vmatpush1.msra.mxu0 0.0
      %947 = vmatprep.subr.mxu0 0.0
      %948 = vmatpush1.msra.mxu0 0.0
      %949 = vmatprep.subr.mxu0 0.0
      %950 = vmatpush1.msra.mxu0 0.0
      %951 = vmatprep.subr.mxu0 0.0
      %952 = vmatpush1.msra.mxu0 0.0
      %953 = vmatprep.subr.mxu0 0.0
      %954 = vmatpush1.msra.mxu0 0.0
      %955 = vmatprep.subr.mxu0 0.0
      %956 = vmatpush1.msra.mxu0 0.0
      %957 = vmatprep.subr.mxu0 0.0
      %958 = vmatpush1.msra.mxu0 0.0
      %959 = vmatprep.subr.mxu0 0.0
      %960 = vmatpush1.msra.mxu0 0.0
      %961 = vmatprep.subr.mxu0 0.0
      %962 = vmatpush1.msra.mxu0 0.0
      %963 = vmatprep.subr.mxu0 0.0
      %964 = vmatpush1.msra.mxu0 0.0
      %965 = vmatprep.subr.mxu0 0.0
      %966 = vmatpush1.msra.mxu0 0.0
      %967 = vmatprep.subr.mxu0 0.0
      %968 = vmatpush1.msra.mxu0 0.0
      %969 = vmatprep.subr.mxu0 0.0
      %970 = vmatpush1.msra.mxu0 0.0
      %971 = vmatprep.subr.mxu0 0.0
      %972 = vmatpush1.msra.mxu0 0.0
      %973 = vmatprep.subr.mxu0 0.0
      %974 = vmatpush1.msra.mxu0 0.0
      %975 = vmatprep.subr.mxu0 0.0
      %976 = vmatpush1.msra.mxu0 0.0
      %977 = vmatprep.subr.mxu0 0.0
      %978 = vmatpush1.msra.mxu0 0.0
      %979 = vmatprep.subr.mxu0 0.0
      %980 = vmatpush1.msra.mxu0 0.0
      %981 = vmatprep.subr.mxu0 0.0
      %982 = vmatpush1.msra.mxu0 0.0
      %983 = vmatprep.subr.mxu0 0.0
      %984 = vmatpush1.msra.mxu0 0.0
      %985 = vmatprep.subr.mxu0 0.0
      %986 = vmatpush1.msra.mxu0 0.0
      %987 = vmatprep.subr.mxu0 0.0
      %988 = vmatpush1.msra.mxu0 0.0
      %989 = vmatprep.mubr.f32.mxu0 0.0
      %990 = vmatmul.mubr.f32.gmra.mrb[0].mxu0 %v824
      %v991 = vpop.f32.mrb[0].mxu0
      %v992 = vadd.f32 0.0, %v991
      %v993 = vpop.f32.mrb[0].mxu0
      %994 = vmatprep.mubr.f32.mxu0 0.0
      %995 = vmatmul.mubr.f32.gmra.mrb[0].mxu0 %v826
      %v996 = vpop.f32.mrb[0].mxu0
      %v997 = vadd.f32 0.0, %v996
      %v998 = vpop.f32.mrb[0].mxu0
      %999 = vmatprep.mubr.f32.mxu0 0.0
      %1000 = vmatmul.mubr.f32.gmra.mrb[0].mxu0 %v828
      %v1001 = vpop.f32.mrb[0].mxu0
      %v1002 = vadd.f32 0.0, %v1001
      %v1003 = vpop.f32.mrb[0].mxu0
      %1004 = vmatprep.mubr.f32.mxu0 0.0
      %1005 = vmatmul.mubr.f32.gmra.mrb[0].mxu0 %v920
      %v1006 = vpop.f32.mrb[0].mxu0
      %v1007 = vadd.f32 0.0, %v1006
      %v1008 = vpop.f32.mrb[0].mxu0
      %1009 = vdwg.mxu0
      %v1010 = vadd.f32 %v900, %v992
      %v1011 = vadd.f32 %v905, %v997
      %v1012 = vadd.f32 %v910, %v1002
      %v1013 = vadd.f32 %v915, %v1007
      %s1014 = scalar_lea.vmem %s3, 12
      %v1015 = vld [vmem:[%s1014] sm:$0xf]
      %v1017 = vsel %vm720, %v716, 0
      %v1020 = vsel %vm733, %v1015, 0
      %1022 = vmatprep.subr.mxu0 0.0
      %1023 = vmatpush1.msra.mxu0 %v1020
      %1024 = vmatprep.subr.mxu0 0.0
      %1025 = vmatpush1.msra.mxu0 0.0
      %1026 = vmatprep.subr.mxu0 0.0
      %1027 = vmatpush1.msra.mxu0 0.0
      %1028 = vmatprep.subr.mxu0 0.0
      %1029 = vmatpush1.msra.mxu0 0.0
      %1030 = vmatprep.subr.mxu0 0.0
      %1031 = vmatpush1.msra.mxu0 0.0
      %1032 = vmatprep.subr.mxu0 0.0
      %1033 = vmatpush1.msra.mxu0 0.0
      %1034 = vmatprep.subr.mxu0 0.0
      %1035 = vmatpush1.msra.mxu0 0.0
      %1036 = vmatprep.subr.mxu0 0.0
      %1037 = vmatpush1.msra.mxu0 0.0
      %1038 = vmatprep.subr.mxu0 0.0
      %1039 = vmatpush1.msra.mxu0 0.0
      %1040 = vmatprep.subr.mxu0 0.0
      %1041 = vmatpush1.msra.mxu0 0.0
      %1042 = vmatprep.subr.mxu0 0.0
      %1043 = vmatpush1.msra.mxu0 0.0
      %1044 = vmatprep.subr.mxu0 0.0
      %1045 = vmatpush1.msra.mxu0 0.0
      %1046 = vmatprep.subr.mxu0 0.0
      %1047 = vmatpush1.msra.mxu0 0.0
      %1048 = vmatprep.subr.mxu0 0.0
      %1049 = vmatpush1.msra.mxu0 0.0
      %1050 = vmatprep.subr.mxu0 0.0
      %1051 = vmatpush1.msra.mxu0 0.0
      %1052 = vmatprep.subr.mxu0 0.0
      %1053 = vmatpush1.msra.mxu0 0.0
      %1054 = vmatprep.subr.mxu0 0.0
      %1055 = vmatpush1.msra.mxu0 0.0
      %1056 = vmatprep.subr.mxu0 0.0
      %1057 = vmatpush1.msra.mxu0 0.0
      %1058 = vmatprep.subr.mxu0 0.0
      %1059 = vmatpush1.msra.mxu0 0.0
      %1060 = vmatprep.subr.mxu0 0.0
      %1061 = vmatpush1.msra.mxu0 0.0
      %1062 = vmatprep.subr.mxu0 0.0
      %1063 = vmatpush1.msra.mxu0 0.0
      %1064 = vmatprep.subr.mxu0 0.0
      %1065 = vmatpush1.msra.mxu0 0.0
      %1066 = vmatprep.subr.mxu0 0.0
      %1067 = vmatpush1.msra.mxu0 0.0
      %1068 = vmatprep.subr.mxu0 0.0
      %1069 = vmatpush1.msra.mxu0 0.0
      %1070 = vmatprep.subr.mxu0 0.0
      %1071 = vmatpush1.msra.mxu0 0.0
      %1072 = vmatprep.subr.mxu0 0.0
      %1073 = vmatpush1.msra.mxu0 0.0
      %1074 = vmatprep.subr.mxu0 0.0
      %1075 = vmatpush1.msra.mxu0 0.0
      %1076 = vmatprep.subr.mxu0 0.0
      %1077 = vmatpush1.msra.mxu0 0.0
      %1078 = vmatprep.subr.mxu0 0.0
      %1079 = vmatpush1.msra.mxu0 0.0
      %1080 = vmatprep.subr.mxu0 0.0
      %1081 = vmatpush1.msra.mxu0 0.0
      %1082 = vmatprep.subr.mxu0 0.0
      %1083 = vmatpush1.msra.mxu0 0.0
      %1084 = vmatprep.subr.mxu0 0.0
      %1085 = vmatpush1.msra.mxu0 0.0
      %1086 = vmatprep.mubr.f32.mxu0 0.0
      %1087 = vmatmul.mubr.f32.gmra.mrb[0].mxu0 %v725
      %v1088 = vpop.f32.mrb[0].mxu0
      %v1089 = vadd.f32 0.0, %v1088
      %v1090 = vpop.f32.mrb[0].mxu0
      %1091 = vmatprep.mubr.f32.mxu0 0.0
      %1092 = vmatmul.mubr.f32.gmra.mrb[0].mxu0 %v728
      %v1093 = vpop.f32.mrb[0].mxu0
      %v1094 = vadd.f32 0.0, %v1093
      %v1095 = vpop.f32.mrb[0].mxu0
      %1096 = vmatprep.mubr.f32.mxu0 0.0
      %1097 = vmatmul.mubr.f32.gmra.mrb[0].mxu0 %v731
      %v1098 = vpop.f32.mrb[0].mxu0
      %v1099 = vadd.f32 0.0, %v1098
      %v1100 = vpop.f32.mrb[0].mxu0
      %1101 = vmatprep.mubr.f32.mxu0 0.0
      %1102 = vmatmul.mubr.f32.gmra.mrb[0].mxu0 %v1017
      %v1103 = vpop.f32.mrb[0].mxu0
      %v1104 = vadd.f32 0.0, %v1103
      %v1105 = vpop.f32.mrb[0].mxu0
      %1106 = vdwg.mxu0
      %v1107 = vadd.f32 %v1010, %v1089
      %v1108 = vadd.f32 %v1011, %v1094
      %v1109 = vadd.f32 %v1012, %v1099
      %v1110 = vadd.f32 %v1013, %v1104
      %v1111 = vld [vmem:[%s7] sm:$0x1]
      %v1113 = vlaneseq
      %v1114 = vshrl.u32 %v1113, 7
      %v1115 = vsub.s32 0, %v1114
      %v1116 = vrot.slane %v1111, %v1115
      %v1118 = vmul.f32 %v1107, %v1116
      %v1119 = vmul.f32 %v1108, %v1116
      %v1120 = vmul.f32 %v1109, %v1116
      %v1121 = vmul.f32 %v1110, %v1116
      %v1122 = vld [vmem:[%s8] sm:$0x1]
      %v1124 = vlaneseq
      %v1125 = vshrl.u32 %v1124, 7
      %v1126 = vsub.s32 0, %v1125
      %v1127 = vrot.slane %v1122, %v1126
      %v1129 = vadd.f32 %v1118, %v1127
      %v1130 = vadd.f32 %v1119, %v1127
      %v1131 = vadd.f32 %v1120, %v1127
      %v1132 = vadd.f32 %v1121, %v1127
      %v1133 = vmax.f32 %v1129, 0.0
      %v1134 = vmax.f32 %v1130, 0.0
      %v1135 = vmax.f32 %v1131, 0.0
      %v1136 = vmax.f32 %v1132, 0.0
      %v1137 = vld [vmem:[%s4] sm:$0xff]
      %v1138 = vld [vmem:[%s4 + $0x8] sm:$0xff]
      %v1140 = vsel %vm491, %v1133, 0
      %v1143 = vsel %vm491, %v1134, 0
      %v1146 = vsel %vm491, %v1135, 0
      %v1149 = vsel %vm491, %v1136, 0
      %1151 = vmatprep.subr.mxu0 0.0
      %1152 = vmatpush1.msra.mxu0 %v1137
      %1153 = vmatprep.subr.mxu0 0.0
      %1154 = vmatpush1.msra.mxu0 %v1138
      %1155 = vmatprep.subr.mxu0 0.0
      %1156 = vmatpush1.msra.mxu0 0.0
      %1157 = vmatprep.subr.mxu0 0.0
      %1158 = vmatpush1.msra.mxu0 0.0
      %1159 = vmatprep.subr.mxu0 0.0
      %1160 = vmatpush1.msra.mxu0 0.0
      %1161 = vmatprep.subr.mxu0 0.0
      %1162 = vmatpush1.msra.mxu0 0.0
      %1163 = vmatprep.subr.mxu0 0.0
      %1164 = vmatpush1.msra.mxu0 0.0
      %1165 = vmatprep.subr.mxu0 0.0
      %1166 = vmatpush1.msra.mxu0 0.0
      %1167 = vmatprep.subr.mxu0 0.0
      %1168 = vmatpush1.msra.mxu0 0.0
      %1169 = vmatprep.subr.mxu0 0.0
      %1170 = vmatpush1.msra.mxu0 0.0
      %1171 = vmatprep.subr.mxu0 0.0
      %1172 = vmatpush1.msra.mxu0 0.0
      %1173 = vmatprep.subr.mxu0 0.0
      %1174 = vmatpush1.msra.mxu0 0.0
      %1175 = vmatprep.subr.mxu0 0.0
      %1176 = vmatpush1.msra.mxu0 0.0
      %1177 = vmatprep.subr.mxu0 0.0
      %1178 = vmatpush1.msra.mxu0 0.0
      %1179 = vmatprep.subr.mxu0 0.0
      %1180 = vmatpush1.msra.mxu0 0.0
      %1181 = vmatprep.subr.mxu0 0.0
      %1182 = vmatpush1.msra.mxu0 0.0
      %1183 = vmatprep.subr.mxu0 0.0
      %1184 = vmatpush1.msra.mxu0 0.0
      %1185 = vmatprep.subr.mxu0 0.0
      %1186 = vmatpush1.msra.mxu0 0.0
      %1187 = vmatprep.subr.mxu0 0.0
      %1188 = vmatpush1.msra.mxu0 0.0
      %1189 = vmatprep.subr.mxu0 0.0
      %1190 = vmatpush1.msra.mxu0 0.0
      %1191 = vmatprep.subr.mxu0 0.0
      %1192 = vmatpush1.msra.mxu0 0.0
      %1193 = vmatprep.subr.mxu0 0.0
      %1194 = vmatpush1.msra.mxu0 0.0
      %1195 = vmatprep.subr.mxu0 0.0
      %1196 = vmatpush1.msra.mxu0 0.0
      %1197 = vmatprep.subr.mxu0 0.0
      %1198 = vmatpush1.msra.mxu0 0.0
      %1199 = vmatprep.subr.mxu0 0.0
      %1200 = vmatpush1.msra.mxu0 0.0
      %1201 = vmatprep.subr.mxu0 0.0
      %1202 = vmatpush1.msra.mxu0 0.0
      %1203 = vmatprep.subr.mxu0 0.0
      %1204 = vmatpush1.msra.mxu0 0.0
      %1205 = vmatprep.subr.mxu0 0.0
      %1206 = vmatpush1.msra.mxu0 0.0
      %1207 = vmatprep.subr.mxu0 0.0
      %1208 = vmatpush1.msra.mxu0 0.0
      %1209 = vmatprep.subr.mxu0 0.0
      %1210 = vmatpush1.msra.mxu0 0.0
      %1211 = vmatprep.subr.mxu0 0.0
      %1212 = vmatpush1.msra.mxu0 0.0
      %1213 = vmatprep.subr.mxu0 0.0
      %1214 = vmatpush1.msra.mxu0 0.0
      %1215 = vmatprep.mubr.f32.mxu0 0.0
      %1216 = vmatmul.mubr.f32.gmra.mrb[0].mxu0 %v1140
      %v1217 = vpop.f32.mrb[0].mxu0
      %v1218 = vadd.f32 0.0, %v1217
      %v1219 = vpop.f32.mrb[0].mxu0
      %1220 = vmatprep.mubr.f32.mxu0 0.0
      %1221 = vmatmul.mubr.f32.gmra.mrb[0].mxu0 %v1143
      %v1222 = vpop.f32.mrb[0].mxu0
      %v1223 = vadd.f32 0.0, %v1222
      %v1224 = vpop.f32.mrb[0].mxu0
      %1225 = vmatprep.mubr.f32.mxu0 0.0
      %1226 = vmatmul.mubr.f32.gmra.mrb[0].mxu0 %v1146
      %v1227 = vpop.f32.mrb[0].mxu0
      %v1228 = vadd.f32 0.0, %v1227
      %v1229 = vpop.f32.mrb[0].mxu0
      %1230 = vmatprep.mubr.f32.mxu0 0.0
      %1231 = vmatmul.mubr.f32.gmra.mrb[0].mxu0 %v1149
      %v1232 = vpop.f32.mrb[0].mxu0
      %v1233 = vadd.f32 0.0, %v1232
      %v1234 = vpop.f32.mrb[0].mxu0
      %1235 = vdwg.mxu0
      %v1236 = vld [vmem:[%s9] sm:$0x1]
      %v1238 = vlaneseq
      %v1239 = vshrl.u32 %v1238, 7
      %v1240 = vsub.s32 0, %v1239
      %v1241 = vrot.slane %v1236, %v1240
      %v1243 = vmul.f32 %v1218, %v1241
      %v1244 = vmul.f32 %v1223, %v1241
      %v1245 = vmul.f32 %v1228, %v1241
      %v1246 = vmul.f32 %v1233, %v1241
      %v1247 = vld [vmem:[%s10] sm:$0x1]
      %v1249 = vlaneseq
      %v1250 = vshrl.u32 %v1249, 7
      %v1251 = vsub.s32 0, %v1250
      %v1252 = vrot.slane %v1247, %v1251
      %v1254 = vadd.f32 %v1243, %v1252
      %v1255 = vadd.f32 %v1244, %v1252
      %v1256 = vadd.f32 %v1245, %v1252
      %v1257 = vadd.f32 %v1246, %v1252
      %v1258 = vmax.f32 %v1254, 0.0
      %v1259 = vmax.f32 %v1255, 0.0
      %v1260 = vmax.f32 %v1256, 0.0
      %v1261 = vmax.f32 %v1257, 0.0
      %vm1262 = vcmask 261120
      %1263 = vst.msk [vmem:[%s483] sm:$0xff] %vm1262, %v1258
      %1264 = vst.msk [vmem:[%s483 + $0x8] sm:$0xff] %vm1262, %v1259
      %1265 = vst.msk [vmem:[%s483 + $0x10] sm:$0xff] %vm1262, %v1260
      %1266 = vst.msk [vmem:[%s483 + $0x18] sm:$0xff] %vm1262, %v1261
      %s1267 = smul.u32 4, %s27
      %p1268 = scmp.lt.s32.totalorder %s26, 1
      %s1269 = scalar_select %p1268, %s26, 1
      %p1270 = scmp.lt.s32.totalorder %s1267, 7
      %s1271 = scalar_select %p1270, %s1267, 7
      %s1272 = smul.addr %s1269, 8
      %s1273 = sadd.s32 %s1271, %s1272
      %s1274 = smul.addr %s1273, 8
      %s1275 = scalar_lea.vmem %s11, %s1274
      // Predicated region
      $region65: #{decoder_block_forward.1} parent=63 // pred_check
        %p1276 = pneg %p307
      $region66: #{decoder_block_forward.1} parent=63 // pred_check_branch
        %1278 = sbr.rel (%p1276) target = $region68
      $region67: #{decoder_block_forward.1} parent=63 // pred_region
        %s1279 = smul.u32 4, %s27
      $region68: #{decoder_block_forward.1} parent=63 // pred_fallthru
        _
    $region64: #{decoder_block_forward.1} parent=5 // pred_fallthru
      _
    %p1280 = scmp.le.s32.totalorder 2, %s17
    // Predicated region
    $region69: #{decoder_block_forward.1} parent=5 // pred_check
      %p1281 = pneg %p1280
    $region70: #{decoder_block_forward.1} parent=5 // pred_check_branch
      %1283 = sbr.rel (%p1281) target = $region72
    $region71: #{decoder_block_forward.1} parent=5 // pred_region
      %s1284 = ssub.s32 %s17, 2
      // Predicated region
      $region73: #{decoder_block_forward.1} parent=71 // pred_check
        %p1285 = pneg %p313
      $region74: #{decoder_block_forward.1} parent=71 // pred_check_branch
        %1287 = sbr.rel (%p1285) target = $region76
      $region75: #{decoder_block_forward.1} parent=71 // pred_region
        %s1288 = smul.u32 4, %s29
        %p1289 = scmp.lt.s32.totalorder %s28, 1
        %s1290 = scalar_select %p1289, %s28, 1
        %p1291 = scmp.lt.s32.totalorder %s1288, 7
        %s1292 = scalar_select %p1291, %s1288, 7
        %s1293 = smul.addr %s1290, 8
        %s1294 = sadd.s32 %s1292, %s1293
        %s1295 = smul.addr %s1294, 8
        %s1296 = scalar_lea.vmem %s11, %s1295
      $region76: #{decoder_block_forward.1} parent=71 // pred_fallthru
        _
    $region72: #{decoder_block_forward.1} parent=5 // pred_fallthru
      _
  $region6: #{decoder_block_forward.1} parent=0 // loop_footer
    %s21 = sadd.s32 1, %s17
  $region7: #{decoder_block_forward.1} parent=0 // loop_footer_branch
    %16 = sbr.rel target = $region3
  $region8: #{decoder_block_forward.1} parent=0 // loop_exit
    _

</llo_original>
